<compile_context>
chip_gen: v7x
topology: tpu7x:2x2x1
jax: 0.10.0
libtpu: 0.0.40
codegen_flags: <defaults>
</compile_context>

<pallas_src>
import functools

import jax
import jax.numpy as jnp
from jax.experimental import pallas as pl
from jax.experimental.pallas import tpu as pltpu


# ----------------------------------------------------------------------------
# Hardware-aware knobs
# ----------------------------------------------------------------------------

@functools.lru_cache(maxsize=None)
def _vmem_limit_bytes():
    """Scoped-VMEM limit: half the chip's VMEM (=> 32 MiB on v7x, 64 MiB on
    v5e/v6e).  None (compiler default) if the query is unavailable."""
    try:
        cap = int(pltpu.get_tpu_info().vmem_capacity_bytes)
    except Exception:
        return None
    return max(32 * 1024 * 1024, min(cap // 2, 64 * 1024 * 1024))


def _compiler_params(dimension_semantics):
    return pltpu.CompilerParams(dimension_semantics=dimension_semantics,
                                vmem_limit_bytes=_vmem_limit_bytes())


# ----------------------------------------------------------------------------
# Tile pickers
# ----------------------------------------------------------------------------

def _lane_pad(n):
    return ((n + 127) // 128) * 128


def _pick_tile_n(N):
    """Full N below 128 (no dead MXU columns / padded writeback); otherwise a
    128-multiple capped so deep layers keep >=2 parallel N blocks (v7x)."""
    if N <= 128:
        return N
    if N >= 1024 and N % 512 == 0:
        return 512
    if N % 256 == 0:
        return 256
    if N % 128 == 0:
        return 128
    return N


def _pick_tile_m_conv(M, row, tk, tn, budget=6 << 20):
    """M tile for the implicit-GEMM conv: a whole number of W-padded rows
    (blocks must start at a padded-row boundary), a multiple of 8 sublanes
    (or the full M), as large as the VMEM budget allows while preferring
    >=2 M blocks so both v7x TensorCores get work."""
    rows_total = M // row
    valid = []
    for k in range(1, rows_total + 1):
        if rows_total % k:
            continue
        tm = k * row
        if tm % 8 != 0 and k != rows_total:
            continue
        valid.append(tm)
    if not valid:
        return M
    bpr = 2 * _lane_pad(tk) + 6 * _lane_pad(tn)   # bf16 x + f32 acc + bf16 out
    fits = [tm for tm in valid if tm * bpr <= budget]
    pool = fits if fits else [min(valid)]
    multi = [tm for tm in pool if M // tm >= 2]
    return max(multi) if multi else max(pool)


def _pick_tile_m_mm(M, K, N, budget=6 << 20):
    """M tile for the plain (1x1-conv) matmul."""
    if M <= 1024 or M % 8 != 0:
        return M
    bpr = 2 * _lane_pad(K) + 6 * _lane_pad(N)
    cands = [tm for tm in range(8, M + 1, 8)
             if M % tm == 0 and tm * bpr <= budget]
    if not cands:
        return M
    multi = [tm for tm in cands if M // tm >= 2]
    return max(multi) if multi else max(cands)


# ----------------------------------------------------------------------------
# Pallas kernels
# ----------------------------------------------------------------------------

def _conv3x3_kernel(x_ref, w_ref, b_ref, o_ref, acc_ref, *, relu):
    """One (dy, k-chunk) reduction step of the implicit-GEMM 3x3 conv.

    x_ref : (1, TM, TK)    dy-shifted, W-padded input rows (bf16)
    w_ref : (1, 3, TK, TN) weights for this dy - all three dx taps (bf16)
    b_ref : (1, TN)        per-channel bias (BN scale already folded into w)
    The three dx taps are one-row sublane shifts of the resident x block;
    rows that pick up wrapped neighbours are exactly the discarded W-pad
    output columns (M blocks are aligned to padded-row starts).
    """
    dy = pl.program_id(2)
    kk = pl.program_id(3)

    @pl.when((dy == 0) & (kk == 0))
    def _():
        acc_ref[...] = jnp.zeros_like(acc_ref)

    x = x_ref[0, :, :]                                        # (TM, TK)
    # dx = 1 (centre tap): out[m] uses x[m]
    acc_ref[...] += jnp.dot(x, w_ref[0, 1, :, :],
                            preferred_element_type=jnp.float32)
    # dx = 0 (left tap): out[m] uses x[m - 1]
    x_dn = jnp.concatenate([x[-1:, :], x[:-1, :]], axis=0)
    acc_ref[...] += jnp.dot(x_dn, w_ref[0, 0, :, :],
                            preferred_element_type=jnp.float32)
    # dx = 2 (right tap): out[m] uses x[m + 1]
    x_up = jnp.concatenate([x[1:, :], x[:1, :]], axis=0)
    acc_ref[...] += jnp.dot(x_up, w_ref[0, 2, :, :],
                            preferred_element_type=jnp.float32)

    @pl.when((dy == 2) & (kk == pl.num_programs(3) - 1))
    def _():
        y = acc_ref[...] + b_ref[...]
        if relu:
            y = jnp.maximum(y, 0.0)
        o_ref[...] = y.astype(o_ref.dtype)


def _mm_bias_kernel(x_ref, w_ref, b_ref, o_ref, *, relu):
    """1x1 conv: (TM, K) @ (K, N) + bias (+ ReLU), full K in one step."""
    y = jnp.dot(x_ref[...], w_ref[...], preferred_element_type=jnp.float32)
    y = y + b_ref[...]
    if relu:
        y = jnp.maximum(y, 0.0)
    o_ref[...] = y.astype(o_ref.dtype)


def _maxpool_kernel(x_ref, o_ref):
    """2x2 max pool on a (TH, 2, Wo, 2C) block -> (TH, Wo, C)."""
    c = o_ref.shape[-1]
    m = jnp.maximum(x_ref[:, 0, :, :], x_ref[:, 1, :, :])     # (TH, Wo, 2C)
    o_ref[...] = jnp.maximum(m[:, :, :c], m[:, :, c:])


# ----------------------------------------------------------------------------
# Pallas wrappers
# ----------------------------------------------------------------------------

def conv3x3_bn_act(x, prm, relu=True, out_dtype=jnp.bfloat16):
    """3x3 conv (stride 1, pad 1) + folded-BN bias + optional ReLU, NHWC."""
    n, h, w, c = x.shape
    wk = prm["w"]                        # (3, 3, C, Cout) bf16, BN scale folded
    cout = wk.shape[-1]
    row = w + 2                          # W-padded row length
    M = n * h * row

    # dy-shifted, W-padded views of the input, stacked: (3, M, C).
    xp = jnp.pad(x.astype(jnp.bfloat16), ((0, 0), (1, 1), (1, 1), (0, 0)))
    xv = jnp.stack([xp[:, dy:dy + h, :, :].reshape(M, c) for dy in range(3)], 0)

    tk = c                               # full-K per tap (C <= 2048 here)
    tn = _pick_tile_n(cout)
    tm = _pick_tile_m_conv(M, row, tk, tn)
    bias = prm["bias"].astype(jnp.float32).reshape(1, cout)

    out = pl.pallas_call(
        functools.partial(_conv3x3_kernel, relu=relu),
        out_shape=jax.ShapeDtypeStruct((M, cout), out_dtype),
        grid_spec=pltpu.PrefetchScalarGridSpec(
            num_scalar_prefetch=0,
            grid=(M // tm, cout // tn, 3, c // tk),
            in_specs=[
                pl.BlockSpec((1, tm, tk), lambda i, j, dy, kk: (dy, i, kk)),
                pl.BlockSpec((1, 3, tk, tn), lambda i, j, dy, kk: (dy, 0, kk, j)),
                pl.BlockSpec((1, tn), lambda i, j, dy, kk: (0, j)),
            ],
            out_specs=pl.BlockSpec((tm, tn), lambda i, j, dy, kk: (i, j)),
            scratch_shapes=[pltpu.VMEM((tm, tn), jnp.float32)],
        ),
        compiler_params=_compiler_params(
            ("parallel", "parallel", "arbitrary", "arbitrary")),
    )(xv, wk, bias)

    # Drop the two pad columns of the padded-width output layout.
    return out.reshape(n, h, row, cout)[:, :, 1:w + 1, :]


def conv1x1_bias_act(x, prm, relu=True, out_dtype=jnp.bfloat16):
    """1x1 conv + bias (+ ReLU); used by the final `classify` layer."""
    n, h, w, c = x.shape
    wm = prm["w"]                        # (C, Cout) bf16
    cout = wm.shape[-1]
    M = n * h * w
    xm = x.astype(jnp.bfloat16).reshape(M, c)
    bias = prm["bias"].astype(jnp.float32).reshape(1, cout)
    tm = _pick_tile_m_mm(M, c, cout)

    out = pl.pallas_call(
        functools.partial(_mm_bias_kernel, relu=relu),
        out_shape=jax.ShapeDtypeStruct((M, cout), out_dtype),
        grid_spec=pltpu.PrefetchScalarGridSpec(
            num_scalar_prefetch=0,
            grid=(M // tm,),
            in_specs=[
                pl.BlockSpec((tm, c), lambda i: (i, 0)),
                pl.BlockSpec((c, cout), lambda i: (0, 0)),
                pl.BlockSpec((1, cout), lambda i: (0, 0)),
            ],
            out_specs=pl.BlockSpec((tm, cout), lambda i: (i, 0)),
        ),
        compiler_params=_compiler_params(("parallel",)),
    )(xm, wm, bias)
    return out.reshape(n, h, w, cout)


def maxpool2x2(x):
    """F.max_pool2d(kernel=2, stride=2) on NHWC, single-input tiled kernel."""
    n, h, w, c = x.shape
    ho, wo = h // 2, w // 2
    r = n * ho
    # Free metadata reshape: H-pairs go to dim 1, W-pairs merge into 2C lanes.
    xr = x.reshape(r, 2, wo, 2 * c)

    row_bytes = 4 * wo * _lane_pad(2 * c)          # bf16 in-block bytes / r-row
    budget_rows = max(1, (2 << 20) // row_bytes)
    divs = [d for d in range(1, r + 1) if r % d == 0 and d <= budget_rows]
    multi = [d for d in divs if r // d >= 2]       # keep 2 blocks for v7x 2 TCs
    th = max(multi) if multi else max(divs)

    out = pl.pallas_call(
        _maxpool_kernel,
        out_shape=jax.ShapeDtypeStruct((r, wo, c), x.dtype),
        grid_spec=pltpu.PrefetchScalarGridSpec(
            num_scalar_prefetch=0,
            grid=(r // th,),
            in_specs=[pl.BlockSpec((th, 2, wo, 2 * c), lambda i: (i, 0, 0, 0))],
            out_specs=pl.BlockSpec((th, wo, c), lambda i: (i, 0, 0)),
        ),
        compiler_params=_compiler_params(("parallel",)),
    )(xr)
    return out.reshape(n, ho, wo, c)


# ----------------------------------------------------------------------------
# Glue (plain JAX)
# ----------------------------------------------------------------------------

def upsample2x_bilinear(x):
    """Bilinear 2x upsample, align_corners=False (F.upsample semantics)."""
    def up_axis(a, axis):
        h = a.shape[axis]
        idx = jnp.arange(h)
        left = jnp.take(a, jnp.maximum(idx - 1, 0), axis=axis)
        right = jnp.take(a, jnp.minimum(idx + 1, h - 1), axis=axis)
        even = 0.25 * left + 0.75 * a
        odd = 0.75 * a + 0.25 * right
        stacked = jnp.stack([even, odd], axis=axis + 1)
        new_shape = list(a.shape)
        new_shape[axis] = 2 * h
        return stacked.reshape(new_shape)

    return up_axis(up_axis(x, 1), 2)


def conv_bn_relu(x, prm, relu=True, out_dtype=jnp.bfloat16):
    if prm["w"].ndim == 4:
        return conv3x3_bn_act(x, prm, relu, out_dtype)
    return conv1x1_bias_act(x, prm, relu, out_dtype)


def stack_encoder(x, prms):
    y = conv_bn_relu(x, prms[0])
    y = conv_bn_relu(y, prms[1])
    return y, maxpool2x2(y)


def stack_decoder(x_big, x, prms):
    # TODO(synk): upsample+concat could be fused into the first conv's K loop.
    y = upsample2x_bilinear(x)                 # to x_big's spatial size (2x)
    y = jnp.concatenate([y, x_big], axis=-1)   # torch.cat([y, x_big], dim=1)
    for prm in prms:
        y = conv_bn_relu(y, prm)
    return y


def unet1024_forward(x, p):
    out = x.astype(jnp.bfloat16)               # bf16 activations throughout
    down0, out = stack_encoder(out, p["down0"])
    down1, out = stack_encoder(out, p["down1"])
    down2, out = stack_encoder(out, p["down2"])
    down3, out = stack_encoder(out, p["down3"])
    down4, out = stack_encoder(out, p["down4"])
    down5, out = stack_encoder(out, p["down5"])
    down6, out = stack_encoder(out, p["down6"])

    out = conv_bn_relu(out, p["center"][0])
    out = conv_bn_relu(out, p["center"][1])

    out = stack_decoder(down6, out, p["up6"])
    out = stack_decoder(down5, out, p["up5"])
    out = stack_decoder(down4, out, p["up4"])
    out = stack_decoder(down3, out, p["up3"])
    out = stack_decoder(down2, out, p["up2"])
    out = stack_decoder(down1, out, p["up1"])
    out = stack_decoder(down0, out, p["up0"])

    out = conv_bn_relu(out, p["classify"], relu=False,
                       out_dtype=jnp.float32)   # 1x1 conv + bias, f32 output
    return out[..., 0]                          # squeeze(dim=1)


# ----------------------------------------------------------------------------
# Deterministic parameter initialization (BN scale folded into bf16 weights)
# ----------------------------------------------------------------------------

def _init_conv_bn(key, cin, cout, ksize=3):
    fan_in = ksize * ksize * cin
    shape = (ksize, ksize, cin, cout) if ksize == 3 else (cin, cout)
    w = jax.random.normal(key, shape, dtype=jnp.float32) * jnp.sqrt(2.0 / fan_in)
    # PyTorch BatchNorm2d defaults: gamma=1, beta=0, mean=0, var=1, eps=1e-5.
    bn_scale = 1.0 / jnp.sqrt(jnp.float32(1.0 + 1e-5))
    w = (w * bn_scale).astype(jnp.bfloat16)     # fold scale in f32, then cast
    bias = jnp.zeros((cout,), jnp.float32)
    return {"w": w, "bias": bias}


def init_unet1024_params(key, in_channels):
    keys = iter(jax.random.split(key, 64))

    def enc(cin, cout):
        return [_init_conv_bn(next(keys), cin, cout),
                _init_conv_bn(next(keys), cout, cout)]

    def dec(big, cin, cout):
        return [_init_conv_bn(next(keys), big + cin, cout),
                _init_conv_bn(next(keys), cout, cout),
                _init_conv_bn(next(keys), cout, cout)]

    p = {}
    p["down0"] = enc(in_channels, 16)
    p["down1"] = enc(16, 32)
    p["down2"] = enc(32, 64)
    p["down3"] = enc(64, 128)
    p["down4"] = enc(128, 256)
    p["down5"] = enc(256, 512)
    p["down6"] = enc(512, 1024)
    p["center"] = [_init_conv_bn(next(keys), 1024, 1024),
                   _init_conv_bn(next(keys), 1024, 1024)]
    p["up6"] = dec(1024, 1024, 512)
    p["up5"] = dec(512, 512, 256)
    p["up4"] = dec(256, 256, 128)
    p["up3"] = dec(128, 128, 64)
    p["up2"] = dec(64, 64, 32)
    p["up1"] = dec(32, 32, 16)
    p["up0"] = dec(16, 16, 16)
    # classify: Conv2d(16, 1, kernel_size=1, bias=True), no BN / no ReLU.
    wc = (jax.random.normal(next(keys), (16, 1), jnp.float32) * 0.25
          ).astype(jnp.bfloat16)
    bc = jax.random.normal(next(keys), (1,), jnp.float32) * 0.01
    p["classify"] = {"w": wc, "bias": bc}
    return p


# ----------------------------------------------------------------------------
# Small correctness self-checks (Pallas kernels vs pure-JAX references)
# ----------------------------------------------------------------------------

def _self_check():
    kx, kw = jax.random.split(jax.random.PRNGKey(1))
    x = jax.random.normal(kx, (1, 16, 16, 8), jnp.float32).astype(jnp.bfloat16)
    prm = _init_conv_bn(kw, 8, 16)

    got = conv_bn_relu(x, prm).astype(jnp.float32)
    ref = jax.lax.conv_general_dilated(
        x.astype(jnp.float32), prm["w"].astype(jnp.float32),
        window_strides=(1, 1), padding="SAME",
        dimension_numbers=("NHWC", "HWIO", "NHWC"))
    ref = jnp.maximum(ref + prm["bias"], 0.0)
    assert bool(jnp.allclose(got, ref, atol=5e-2, rtol=5e-2)), "conv3x3 mismatch"

    pooled = maxpool2x2(x).astype(jnp.float32)
    pref = jnp.max(x.astype(jnp.float32).reshape(1, 8, 2, 8, 2, 8), axis=(2, 4))
    assert bool(jnp.allclose(pooled, pref, atol=1e-6)), "maxpool mismatch"


# ----------------------------------------------------------------------------
# Main
# ----------------------------------------------------------------------------

if __name__ == "__main__":
    _self_check()

    # Smallest spatial size that survives 7 levels of 2x2 pooling is 128.
    N, C, H, W = 1, 3, 128, 128

    key = jax.random.PRNGKey(0)
    k_x, k_p = jax.random.split(key)
    x_nchw = jax.random.normal(k_x, (N, C, H, W), dtype=jnp.float32)
    params = init_unet1024_params(k_p, C)

    x_nhwc = jnp.transpose(x_nchw, (0, 2, 3, 1))  # NCHW -> NHWC

    fwd = jax.jit(unet1024_forward)
    out = jax.block_until_ready(fwd(x_nhwc, params))

    assert out.shape == (N, H, W), out.shape
    assert out.dtype == jnp.float32
    assert bool(jnp.all(jnp.isfinite(out)))
    print("KERNEL_OK")
</pallas_src>

<mosaic_0001>
module attributes {stable_mosaic.version = 11 : i64} {
  func.func @_conv3x3_kernel(%arg0: i32, %arg1: i32, %arg2: i32, %arg3: i32, %arg4: memref<1x144x8xbf16, #tpu.memory_space<vmem>>, %arg5: memref<1x3x8x16xbf16, #tpu.memory_space<vmem>>, %arg6: memref<1x16xf32, #tpu.memory_space<vmem>>, %arg7: memref<144x16xbf16, #tpu.memory_space<vmem>>, %arg8: memref<144x16xf32, #tpu.memory_space<vmem>>) attributes {dimension_semantics = [#tpu.dimension_semantics<parallel>, #tpu.dimension_semantics<parallel>, #tpu.dimension_semantics<arbitrary>, #tpu.dimension_semantics<arbitrary>], iteration_bounds = array<i64: 2, 1, 3, 1>, scalar_prefetch = 0 : i64, scratch_operands = 1 : i64, tpu.core_type = #tpu.core_type<tc>, window_params = [{transform_indices = @transform_0, window_bounds = array<i64: 1, 144, 8>}, {transform_indices = @transform_1, window_bounds = array<i64: 1, 3, 8, 16>}, {transform_indices = @transform_2, window_bounds = array<i64: 1, 16>}, {transform_indices = @transform_3, window_bounds = array<i64: 144, 16>}]} {
    %c0_i32 = arith.constant 0 : i32
    %0 = arith.cmpi eq, %arg2, %c0_i32 : i32
    %c0_i32_0 = arith.constant 0 : i32
    %1 = arith.cmpi eq, %arg3, %c0_i32_0 : i32
    %2 = arith.andi %0, %1 : i1
    %3 = arith.extui %2 : i1 to i32
    %c0_i32_1 = arith.constant 0 : i32
    %4 = arith.cmpi ne, %3, %c0_i32_1 : i32
    scf.if %4 {
      %cst_30 = arith.constant 0.000000e+00 : f32
      %36 = vector.broadcast %cst_30 : f32 to vector<144x16xf32>
      %c0_31 = arith.constant 0 : index
      %c0_32 = arith.constant 0 : index
      %37 = vector.load %arg8[%c0_31, %c0_32] : memref<144x16xf32, #tpu.memory_space<vmem>>, vector<144x16xf32>
      tpu.vector_store %arg8[%c0_31, %c0_32], %36 {strides = array<i32>} : memref<144x16xf32, #tpu.memory_space<vmem>>, vector<144x16xf32>,
    } else {
    }
    %c0 = arith.constant 0 : index
    %c0_2 = arith.constant 0 : index
    %c0_3 = arith.constant 0 : index
    %5 = vector.load %arg4[%c0, %c0_2, %c0_3] : memref<1x144x8xbf16, #tpu.memory_space<vmem>>, vector<1x144x8xbf16>
    %6 = vector.shape_cast %5 : vector<1x144x8xbf16> to vector<144x8xbf16>
    %c0_4 = arith.constant 0 : index
    %c0_5 = arith.constant 0 : index
    %7 = vector.load %arg8[%c0_4, %c0_5] : memref<144x16xf32, #tpu.memory_space<vmem>>, vector<144x16xf32>
    %c0_6 = arith.constant 0 : index
    %c1 = arith.constant 1 : index
    %c0_7 = arith.constant 0 : index
    %c0_8 = arith.constant 0 : index
    %8 = vector.load %arg5[%c0_6, %c1, %c0_7, %c0_8] : memref<1x3x8x16xbf16, #tpu.memory_space<vmem>>, vector<1x1x8x16xbf16>
    %9 = vector.shape_cast %8 : vector<1x1x8x16xbf16> to vector<8x16xbf16>
    %cst = arith.constant dense<0.000000e+00> : vector<144x16xf32>
    %10 = tpu.matmul %6, %9, %cst {dimension_numbers = #tpu.dot_dimension_numbers<[1], [0], [0], [1], [0, 0, 1, 1], [], []>} : vector<144x8xbf16>, vector<8x16xbf16>, vector<144x16xf32> -> vector<144x16xf32>
    %11 = arith.addf %7, %10 : vector<144x16xf32>
    %c0_9 = arith.constant 0 : index
    %c0_10 = arith.constant 0 : index
    %12 = vector.load %arg8[%c0_9, %c0_10] : memref<144x16xf32, #tpu.memory_space<vmem>>, vector<144x16xf32>
    tpu.vector_store %arg8[%c0_9, %c0_10], %11 {strides = array<i32>} : memref<144x16xf32, #tpu.memory_space<vmem>>, vector<144x16xf32>,
    %13 = vector.extract_strided_slice %6 {offsets = [143, 0], sizes = [1, 8], strides = [1, 1]} : vector<144x8xbf16> to vector<1x8xbf16>
    %14 = vector.extract_strided_slice %6 {offsets = [0, 0], sizes = [143, 8], strides = [1, 1]} : vector<144x8xbf16> to vector<143x8xbf16>
    %15 = tpu.concatenate %13, %14 in 0 : vector<1x8xbf16>, vector<143x8xbf16> -> vector<144x8xbf16>
    %c0_11 = arith.constant 0 : index
    %c0_12 = arith.constant 0 : index
    %16 = vector.load %arg8[%c0_11, %c0_12] : memref<144x16xf32, #tpu.memory_space<vmem>>, vector<144x16xf32>
    %c0_13 = arith.constant 0 : index
    %c0_14 = arith.constant 0 : index
    %c0_15 = arith.constant 0 : index
    %c0_16 = arith.constant 0 : index
    %17 = vector.load %arg5[%c0_13, %c0_14, %c0_15, %c0_16] : memref<1x3x8x16xbf16, #tpu.memory_space<vmem>>, vector<1x1x8x16xbf16>
    %18 = vector.shape_cast %17 : vector<1x1x8x16xbf16> to vector<8x16xbf16>
    %cst_17 = arith.constant dense<0.000000e+00> : vector<144x16xf32>
    %19 = tpu.matmul %15, %18, %cst_17 {dimension_numbers = #tpu.dot_dimension_numbers<[1], [0], [0], [1], [0, 0, 1, 1], [], []>} : vector<144x8xbf16>, vector<8x16xbf16>, vector<144x16xf32> -> vector<144x16xf32>
    %20 = arith.addf %16, %19 : vector<144x16xf32>
    %c0_18 = arith.constant 0 : index
    %c0_19 = arith.constant 0 : index
    %21 = vector.load %arg8[%c0_18, %c0_19] : memref<144x16xf32, #tpu.memory_space<vmem>>, vector<144x16xf32>
    tpu.vector_store %arg8[%c0_18, %c0_19], %20 {strides = array<i32>} : memref<144x16xf32, #tpu.memory_space<vmem>>, vector<144x16xf32>,
    %22 = vector.extract_strided_slice %6 {offsets = [1, 0], sizes = [143, 8], strides = [1, 1]} : vector<144x8xbf16> to vector<143x8xbf16>
    %23 = vector.extract_strided_slice %6 {offsets = [0, 0], sizes = [1, 8], strides = [1, 1]} : vector<144x8xbf16> to vector<1x8xbf16>
    %24 = tpu.concatenate %22, %23 in 0 : vector<143x8xbf16>, vector<1x8xbf16> -> vector<144x8xbf16>
    %c0_20 = arith.constant 0 : index
    %c0_21 = arith.constant 0 : index
    %25 = vector.load %arg8[%c0_20, %c0_21] : memref<144x16xf32, #tpu.memory_space<vmem>>, vector<144x16xf32>
    %c0_22 = arith.constant 0 : index
    %c2 = arith.constant 2 : index
    %c0_23 = arith.constant 0 : index
    %c0_24 = arith.constant 0 : index
    %26 = vector.load %arg5[%c0_22, %c2, %c0_23, %c0_24] : memref<1x3x8x16xbf16, #tpu.memory_space<vmem>>, vector<1x1x8x16xbf16>
    %27 = vector.shape_cast %26 : vector<1x1x8x16xbf16> to vector<8x16xbf16>
    %cst_25 = arith.constant dense<0.000000e+00> : vector<144x16xf32>
    %28 = tpu.matmul %24, %27, %cst_25 {dimension_numbers = #tpu.dot_dimension_numbers<[1], [0], [0], [1], [0, 0, 1, 1], [], []>} : vector<144x8xbf16>, vector<8x16xbf16>, vector<144x16xf32> -> vector<144x16xf32>
    %29 = arith.addf %25, %28 : vector<144x16xf32>
    %c0_26 = arith.constant 0 : index
    %c0_27 = arith.constant 0 : index
    %30 = vector.load %arg8[%c0_26, %c0_27] : memref<144x16xf32, #tpu.memory_space<vmem>>, vector<144x16xf32>
    tpu.vector_store %arg8[%c0_26, %c0_27], %29 {strides = array<i32>} : memref<144x16xf32, #tpu.memory_space<vmem>>, vector<144x16xf32>,
    %c2_i32 = arith.constant 2 : i32
    %31 = arith.cmpi eq, %arg2, %c2_i32 : i32
    %c0_i32_28 = arith.constant 0 : i32
    %32 = arith.cmpi eq, %arg3, %c0_i32_28 : i32
    %33 = arith.andi %31, %32 : i1
    %34 = arith.extui %33 : i1 to i32
    %c0_i32_29 = arith.constant 0 : i32
    %35 = arith.cmpi ne, %34, %c0_i32_29 : i32
    scf.if %35 {
      %c0_30 = arith.constant 0 : index
      %c0_31 = arith.constant 0 : index
      %36 = vector.load %arg8[%c0_30, %c0_31] : memref<144x16xf32, #tpu.memory_space<vmem>>, vector<144x16xf32>
      %c0_32 = arith.constant 0 : index
      %c0_33 = arith.constant 0 : index
      %37 = vector.load %arg6[%c0_32, %c0_33] : memref<1x16xf32, #tpu.memory_space<vmem>>, vector<1x16xf32>
      %38 = vector.broadcast %37 : vector<1x16xf32> to vector<144x16xf32>
      %39 = arith.addf %36, %38 : vector<144x16xf32>
      %cst_34 = arith.constant 0.000000e+00 : f32
      %40 = vector.broadcast %cst_34 : f32 to vector<144x16xf32>
      %41 = arith.maximumf %39, %40 : vector<144x16xf32>
      %42 = arith.truncf %41 : vector<144x16xf32> to vector<144x16xbf16>
      %c0_35 = arith.constant 0 : index
      %c0_36 = arith.constant 0 : index
      %43 = vector.load %arg7[%c0_35, %c0_36] : memref<144x16xbf16, #tpu.memory_space<vmem>>, vector<144x16xbf16>
      tpu.vector_store %arg7[%c0_35, %c0_36], %42 {strides = array<i32>} : memref<144x16xbf16, #tpu.memory_space<vmem>>, vector<144x16xbf16>,
    } else {
    }
    return
  }
  func.func @transform_0(%arg0: i32, %arg1: i32, %arg2: i32, %arg3: i32) -> (i32, i32, i32) {
    %c0_i32 = arith.constant 0 : i32
    return %arg2, %arg0, %arg3 : i32, i32, i32
  }
  func.func @transform_1(%arg0: i32, %arg1: i32, %arg2: i32, %arg3: i32) -> (i32, i32, i32, i32) {
    %c0_i32 = arith.constant 0 : i32
    %c0_i32_0 = arith.constant 0 : i32
    return %arg2, %c0_i32, %arg3, %arg1 : i32, i32, i32, i32
  }
  func.func @transform_2(%arg0: i32, %arg1: i32, %arg2: i32, %arg3: i32) -> (i32, i32) {
    %c0_i32 = arith.constant 0 : i32
    %c0_i32_0 = arith.constant 0 : i32
    return %c0_i32, %arg1 : i32, i32
  }
  func.func @transform_3(%arg0: i32, %arg1: i32, %arg2: i32, %arg3: i32) -> (i32, i32) {
    %c0_i32 = arith.constant 0 : i32
    return %arg0, %arg1 : i32, i32
  }
}

</mosaic_0001>

<llo_original>
// kernel: tpu_custom_call.1
$region0: #{tpu_custom_call.1}
  #allocation0 [shape = 'u32[]', space=smem, size = 0x4, offset = 0x4, fixed_abs, tag = 'smem constant byte address 0x4 - core index']
  #allocation1 [shape = 'u32[144,128]{1,0:T(1,128)}', space=vmem, size = 0x12000, scoped, tag = 'internal scratch']
  #allocation2 [shape = 'f32[144,16]{1,0:T(8,128)}', space=vmem, size = 0x12000, scoped, tag = 'scratch operand']
  %s0 = inlined_call_operand.vmem [shape: bf16[3,288,8], index: 0, kind: input, shape index: {}]
  %s1 = inlined_call_operand.vmem [shape: bf16[3,3,8,16], index: 1, kind: input, shape index: {}]
  %s2 = inlined_call_operand.vmem [shape: f32[1,16], index: 2, kind: input, shape index: {}]
  %s3 = inlined_call_operand.vmem [shape: bf16[288,16], index: 3, kind: output, shape index: {}]
  %s4 = sld [smem:[#allocation0]]
  $region53: #{tpu_custom_call.1} parent=0
    _
  %s6 = ssub.s32 1, %s4
  %s7 = scalar_select 0, %s6, %s4
  loop: start=0, step=1, limit=8
  $region2: #{tpu_custom_call.1} parent=0 // loop_pre_header
    _
  $region3: #{tpu_custom_call.1} parent=0 // loop_header
    %s9 = sphi 0, %s13
    %p10 = scmp.ge.s32.totalorder %s9, 8
    %s16 = sphi 0, %s42
    %s17 = sphi 0, %s38
    %s18 = sphi 0, %s34
    %s19 = sphi 0, %s30
    %s20 = sphi 0, %s16
    %s21 = sphi 0, %s17
    %s22 = sphi 0, %s18
    %s23 = sphi 0, %s19
    %s24 = sphi 0, %s20
    %s25 = sphi 0, %s21
    %s26 = sphi 0, %s22
    %s27 = sphi 0, %s23
    %s49 = sphi 0, %s51
    %s52 = sphi 0, %s49
    %s53 = sphi 0, %s52
    %s69 = sphi 0, %s53
    %s79 = sphi 0, %s81
    %s82 = sphi 0, %s79
    %s83 = sphi 0, %s82
    %s99 = sphi 0, %s83
    %s105 = sphi 0, %s107
    %s108 = sphi 0, %s105
    %s109 = sphi 0, %s108
    %s125 = sphi 0, %s109
    %s133 = sphi 0, %s135
    %s136 = sphi 0, %s133
    %s137 = sphi 0, %s136
    %s153 = sphi 0, %s137
  $region4: #{tpu_custom_call.1} parent=0 // loop_header_branch
    %12 = sbr.rel (%p10) target = $region8
  $region5: #{tpu_custom_call.1} parent=0 // loop_body
    %s14 = ssub.s32 %s9, 1
    %s15 = ssub.s32 %s9, 2
    %s28 = sadd.s32 1, %s19
    %p29 = scmp.ge.s32.totalorder %s28, 1
    %s30 = scalar_select %p29, 0, %s28
    %s31 = sadd.s32 1, %s18
    %s32 = scalar_select %p29, %s31, %s18
    %p33 = scmp.ge.s32.totalorder %s32, 3
    %s34 = scalar_select %p33, 0, %s32
    %s35 = sadd.s32 1, %s17
    %s36 = scalar_select %p33, %s35, %s17
    %p37 = scmp.ge.s32.totalorder %s36, 1
    %s38 = scalar_select %p37, 0, %s36
    %s39 = sadd.s32 1, %s16
    %s40 = scalar_select %p37, %s39, %s16
    %p41 = scmp.ge.s32.totalorder %s40, 2
    %s42 = scalar_select %p41, 0, %s40
    %s43 = ssub.s32 %s18, %s34
    %s44 = ssub.s32 %s16, %s42
    %s45 = sor.u32 %s43, %s44
    %s46 = ssub.s32 %s19, %s30
    %s47 = sor.u32 %s45, %s46
    %p48 = scmp.eq.s32.totalorder %s47, 0
    %s50 = sadd.s32 %s49, 1
    %s51 = scalar_select %p48, %s49, %s50
    %p54 = pneg %p48
    %p55 = scmp.eq.s32.totalorder %s9, 5
    %p56 = por %p54, %p55
    %p57 = scmp.ne.s32.totalorder %s49, %s52
    %p58 = scmp.eq.s32.totalorder %s9, 0
    %p59 = por %p57, %p58
    %p60 = scmp.ne.s32.totalorder %s49, %s52
    %p61 = scmp.eq.s32.totalorder %s14, 5
    %p62 = por %p60, %p61
    %p63 = scmp.ne.s32.totalorder %s52, %s53
    %p64 = scmp.eq.s32.totalorder %s14, 0
    %p65 = por %p63, %p64
    %p66 = scmp.ne.s32.totalorder %s52, %s53
    %p67 = scmp.eq.s32.totalorder %s15, 5
    %p68 = por %p66, %p67
    %p70 = scmp.ne.s32.totalorder %s53, %s69
    %p71 = scmp.eq.s32.totalorder %s15, 0
    %p72 = por %p70, %p71
    %s73 = ssub.s32 %s18, %s34
    %s74 = ssub.s32 %s19, %s30
    %s75 = sor.u32 %s73, %s74
    %s76 = ssub.s32 %s17, %s38
    %s77 = sor.u32 %s75, %s76
    %p78 = scmp.eq.s32.totalorder %s77, 0
    %s80 = sadd.s32 %s79, 1
    %s81 = scalar_select %p78, %s79, %s80
    %p84 = pneg %p78
    %p85 = scmp.eq.s32.totalorder %s9, 5
    %p86 = por %p84, %p85
    %p87 = scmp.ne.s32.totalorder %s79, %s82
    %p88 = scmp.eq.s32.totalorder %s9, 0
    %p89 = por %p87, %p88
    %p90 = scmp.ne.s32.totalorder %s79, %s82
    %p91 = scmp.eq.s32.totalorder %s14, 5
    %p92 = por %p90, %p91
    %p93 = scmp.ne.s32.totalorder %s82, %s83
    %p94 = scmp.eq.s32.totalorder %s14, 0
    %p95 = por %p93, %p94
    %p96 = scmp.ne.s32.totalorder %s82, %s83
    %p97 = scmp.eq.s32.totalorder %s15, 5
    %p98 = por %p96, %p97
    %p100 = scmp.ne.s32.totalorder %s83, %s99
    %p101 = scmp.eq.s32.totalorder %s15, 0
    %p102 = por %p100, %p101
    %s103 = ssub.s32 %s17, %s38
    %p104 = scmp.eq.s32.totalorder %s103, 0
    %s106 = sadd.s32 %s105, 1
    %s107 = scalar_select %p104, %s105, %s106
    %p110 = pneg %p104
    %p111 = scmp.eq.s32.totalorder %s9, 5
    %p112 = por %p110, %p111
    %p113 = scmp.ne.s32.totalorder %s105, %s108
    %p114 = scmp.eq.s32.totalorder %s9, 0
    %p115 = por %p113, %p114
    %p116 = scmp.ne.s32.totalorder %s105, %s108
    %p117 = scmp.eq.s32.totalorder %s14, 5
    %p118 = por %p116, %p117
    %p119 = scmp.ne.s32.totalorder %s108, %s109
    %p120 = scmp.eq.s32.totalorder %s14, 0
    %p121 = por %p119, %p120
    %p122 = scmp.ne.s32.totalorder %s108, %s109
    %p123 = scmp.eq.s32.totalorder %s15, 5
    %p124 = por %p122, %p123
    %p126 = scmp.ne.s32.totalorder %s109, %s125
    %p127 = scmp.eq.s32.totalorder %s15, 0
    %p128 = por %p126, %p127
    %s129 = ssub.s32 %s16, %s42
    %s130 = ssub.s32 %s17, %s38
    %s131 = sor.u32 %s129, %s130
    %p132 = scmp.eq.s32.totalorder %s131, 0
    %s134 = sadd.s32 %s133, 1
    %s135 = scalar_select %p132, %s133, %s134
    %p138 = pneg %p132
    %p139 = scmp.eq.s32.totalorder %s9, 5
    %p140 = por %p138, %p139
    %p141 = scmp.ne.s32.totalorder %s133, %s136
    %p142 = scmp.eq.s32.totalorder %s9, 0
    %p143 = por %p141, %p142
    %p144 = scmp.ne.s32.totalorder %s133, %s136
    %p145 = scmp.eq.s32.totalorder %s14, 5
    %p146 = por %p144, %p145
    %p147 = scmp.ne.s32.totalorder %s136, %s137
    %p148 = scmp.eq.s32.totalorder %s14, 0
    %p149 = por %p147, %p148
    %p150 = scmp.ne.s32.totalorder %s136, %s137
    %p151 = scmp.eq.s32.totalorder %s15, 5
    %p152 = por %p150, %p151
    %p154 = scmp.ne.s32.totalorder %s137, %s153
    %p155 = scmp.eq.s32.totalorder %s15, 0
    %p156 = por %p154, %p155
    %p157 = scmp.le.s32.totalorder 1, %s9
    %p158 = scmp.lt.s32.totalorder %s9, 7
    %p159 = pnand %p157, %p158
    %p160 = pneg %p159
    // Predicated region
    $region9: #{tpu_custom_call.1} parent=5 // pred_check
      _
    $region10: #{tpu_custom_call.1} parent=5 // pred_check_branch
      %162 = sbr.rel (%p159) target = $region12
    $region11: #{tpu_custom_call.1} parent=5 // pred_region
      %s163 = ssub.s32 %s9, 1
      // Predicated region
      $region13: #{tpu_custom_call.1} parent=11 // pred_check
        %p164 = pneg %p121
      $region14: #{tpu_custom_call.1} parent=11 // pred_check_branch
        %166 = sbr.rel (%p164) target = $region16
      $region15: #{tpu_custom_call.1} parent=11 // pred_region
        %p167 = scmp.lt.s32.totalorder %s21, 0
        %s168 = scalar_select %p167, %s21, 0
        %s169 = scalar_lea.vmem %s2, %s168
      $region16: #{tpu_custom_call.1} parent=11 // pred_fallthru
        _
    $region12: #{tpu_custom_call.1} parent=5 // pred_fallthru
      _
    %p170 = scmp.lt.s32.totalorder %s9, 6
    // Predicated region
    $region17: #{tpu_custom_call.1} parent=5 // pred_check
      %p171 = pneg %p170
    $region18: #{tpu_custom_call.1} parent=5 // pred_check_branch
      %173 = sbr.rel (%p171) target = $region20
    $region19: #{tpu_custom_call.1} parent=5 // pred_region
      // Predicated region
      $region21: #{tpu_custom_call.1} parent=19 // pred_check
        %p174 = pneg %p59
      $region22: #{tpu_custom_call.1} parent=19 // pred_check_branch
        %176 = sbr.rel (%p174) target = $region24
      $region23: #{tpu_custom_call.1} parent=19 // pred_region
        %s177 = smul.u32 18, %s16
        %p178 = scmp.lt.s32.totalorder %s18, 2
        %s179 = scalar_select %p178, %s18, 2
        %p180 = scmp.lt.s32.totalorder %s177, 35
        %s181 = scalar_select %p180, %s177, 35
        %p182 = scmp.lt.s32.totalorder %s19, 0
        %s183 = scalar_select %p182, %s19, 0
        %s184 = sadd.s32 %s183, %s181
        %s185 = smul.addr %s179, 36
        %s186 = sadd.s32 %s184, %s185
        %s187 = smul.addr %s186, 4
        %s188 = scalar_lea.vmem %s0, %s187
        %s189 = smul.u32 18, %s16
      $region24: #{tpu_custom_call.1} parent=19 // pred_fallthru
        _
      // Predicated region
      $region25: #{tpu_custom_call.1} parent=19 // pred_check
        %p190 = pneg %p89
      $region26: #{tpu_custom_call.1} parent=19 // pred_check_branch
        %192 = sbr.rel (%p190) target = $region28
      $region27: #{tpu_custom_call.1} parent=19 // pred_region
        %p193 = scmp.lt.s32.totalorder %s18, 2
        %s194 = scalar_select %p193, %s18, 2
        %p195 = scmp.lt.s32.totalorder %s19, 0
        %s196 = scalar_select %p195, %s19, 0
        %p197 = scmp.lt.s32.totalorder %s17, 0
        %s198 = scalar_select %p197, %s17, 0
        %s199 = sadd.s32 %s198, %s196
        %s200 = smul.addr %s194, 3
        %s201 = sadd.s32 %s199, %s200
        %s202 = smul.addr %s201, 4
        %s203 = scalar_lea.vmem %s1, %s202
      $region28: #{tpu_custom_call.1} parent=19 // pred_fallthru
        _
    $region20: #{tpu_custom_call.1} parent=5 // pred_fallthru
      _
    %p204 = scmp.le.s32.totalorder 1, %s9
    %p205 = scmp.lt.s32.totalorder %s9, 7
    %p206 = pnand %p204, %p205
    %p207 = pneg %p206
    // Predicated region
    $region29: #{tpu_custom_call.1} parent=5 // pred_check
      _
    $region30: #{tpu_custom_call.1} parent=5 // pred_check_branch
      %209 = sbr.rel (%p206) target = $region32
    $region31: #{tpu_custom_call.1} parent=5 // pred_region
      %s210 = ssub.s32 %s9, 1
      %s211 = smul.u32 18, %s20
      %p212 = scmp.lt.s32.totalorder %s22, 2
      %s213 = scalar_select %p212, %s22, 2
      %p214 = scmp.lt.s32.totalorder %s211, 35
      %s215 = scalar_select %p214, %s211, 35
      %p216 = scmp.lt.s32.totalorder %s23, 0
      %s217 = scalar_select %p216, %s23, 0
      %s218 = sadd.s32 %s217, %s215
      %s219 = smul.addr %s213, 36
      %s220 = sadd.s32 %s218, %s219
      %s221 = smul.addr %s220, 4
      %s222 = scalar_lea.vmem %s0, %s221
      %p223 = pneg %p65
      %p224 = pneg %p62
      %p225 = scmp.lt.s32.totalorder %s22, 2
      %s226 = scalar_select %p225, %s22, 2
      %p227 = scmp.lt.s32.totalorder %s23, 0
      %s228 = scalar_select %p227, %s23, 0
      %p229 = scmp.lt.s32.totalorder %s21, 0
      %s230 = scalar_select %p229, %s21, 0
      %s231 = sadd.s32 %s230, %s228
      %s232 = smul.addr %s226, 3
      %s233 = sadd.s32 %s231, %s232
      %s234 = smul.addr %s233, 4
      %s235 = scalar_lea.vmem %s1, %s234
      %p236 = pneg %p95
      %p237 = pneg %p92
      %p238 = scmp.lt.s32.totalorder %s21, 0
      %s239 = scalar_select %p238, %s21, 0
      %s240 = scalar_lea.vmem %s2, %s239
      %p241 = pneg %p121
      %p242 = pneg %p118
      %p243 = pneg %p149
      %p244 = pneg %p146
      %s245 = smul.u32 18, %s20
      %p246 = scmp.lt.s32.totalorder %s245, 35
      %s247 = scalar_select %p246, %s245, 35
      %p248 = scmp.lt.s32.totalorder %s21, 0
      %s249 = scalar_select %p248, %s21, 0
      %s250 = sadd.s32 %s249, %s247
      %s251 = smul.addr %s250, 4
      %s252 = scalar_lea.vmem %s3, %s251
      %s253 = smul.u32 18, %s20
      %p254 = scmp.lt.s32.totalorder %s22, 2
      %s255 = scalar_select %p254, %s22, 2
      %p256 = scmp.lt.s32.totalorder %s253, 35
      %s257 = scalar_select %p256, %s253, 35
      %p258 = scmp.lt.s32.totalorder %s23, 0
      %s259 = scalar_select %p258, %s23, 0
      %s260 = sadd.s32 %s259, %s257
      %s261 = smul.addr %s255, 36
      %s262 = sadd.s32 %s260, %s261
      %s263 = smul.addr %s262, 4
      %s264 = scalar_lea.vmem %s0, %s263
      %s265 = smul.u32 18, %s20
      %p266 = scmp.lt.s32.totalorder %s22, 2
      %s267 = scalar_select %p266, %s22, 2
      %p268 = scmp.lt.s32.totalorder %s23, 0
      %s269 = scalar_select %p268, %s23, 0
      %p270 = scmp.lt.s32.totalorder %s21, 0
      %s271 = scalar_select %p270, %s21, 0
      %s272 = sadd.s32 %s271, %s269
      %s273 = smul.addr %s267, 3
      %s274 = sadd.s32 %s272, %s273
      %s275 = smul.addr %s274, 4
      %s276 = scalar_lea.vmem %s1, %s275
      %p277 = scmp.lt.s32.totalorder %s21, 0
      %s278 = scalar_select %p277, %s21, 0
      %s279 = scalar_lea.vmem %s2, %s278
      %s280 = smul.u32 18, %s20
      %p281 = scmp.lt.s32.totalorder %s280, 35
      %s282 = scalar_select %p281, %s280, 35
      %p283 = scmp.lt.s32.totalorder %s21, 0
      %s284 = scalar_select %p283, %s21, 0
      %s285 = sadd.s32 %s284, %s282
      %s286 = smul.addr %s285, 4
      %s287 = scalar_lea.vmem %s3, %s286
      %s288 = smul.u32 18, %s20
      %p290 = scmp.eq.s32.totalorder %s22, 0
      %p291 = scmp.eq.s32.totalorder %s23, 0
      %p292 = pnand %p290, %p291
      %p293 = pneg %p292
      // Predicated region
      $region33: #{tpu_custom_call.1} parent=31 // pred_check
        _
      $region34: #{tpu_custom_call.1} parent=31 // pred_check_branch
        %295 = sbr.rel (%p292) target = $region36
      $region35: #{tpu_custom_call.1} parent=31 // pred_region
        %vm296 = vcmask 130048
        %297 = vst.msk [vmem:[#allocation2] sm:$0xff] %vm296, 0.0
        %298 = vst.msk [vmem:[#allocation2 + $0x8] sm:$0xff] %vm296, 0.0
        %299 = vst.msk [vmem:[#allocation2 + $0x10] sm:$0xff] %vm296, 0.0
        %300 = vst.msk [vmem:[#allocation2 + $0x18] sm:$0xff] %vm296, 0.0
        %301 = vst.msk [vmem:[#allocation2 + $0x20] sm:$0xff] %vm296, 0.0
        %302 = vst.msk [vmem:[#allocation2 + $0x28] sm:$0xff] %vm296, 0.0
        %303 = vst.msk [vmem:[#allocation2 + $0x30] sm:$0xff] %vm296, 0.0
        %304 = vst.msk [vmem:[#allocation2 + $0x38] sm:$0xff] %vm296, 0.0
        %305 = vst.msk [vmem:[#allocation2 + $0x40] sm:$0xff] %vm296, 0.0
        %306 = vst.msk [vmem:[#allocation2 + $0x48] sm:$0xff] %vm296, 0.0
        %307 = vst.msk [vmem:[#allocation2 + $0x50] sm:$0xff] %vm296, 0.0
        %308 = vst.msk [vmem:[#allocation2 + $0x58] sm:$0xff] %vm296, 0.0
        %309 = vst.msk [vmem:[#allocation2 + $0x60] sm:$0xff] %vm296, 0.0
        %310 = vst.msk [vmem:[#allocation2 + $0x68] sm:$0xff] %vm296, 0.0
        %311 = vst.msk [vmem:[#allocation2 + $0x70] sm:$0xff] %vm296, 0.0
        %312 = vst.msk [vmem:[#allocation2 + $0x78] sm:$0xff] %vm296, 0.0
        %313 = vst.msk [vmem:[#allocation2 + $0x80] sm:$0xff] %vm296, 0.0
        %314 = vst.msk [vmem:[#allocation2 + $0x88] sm:$0xff] %vm296, 0.0
      $region36: #{tpu_custom_call.1} parent=31 // pred_fallthru
        _
      %v315 = vld [vmem:[%s264] sm:$0xf]
      %v316 = vld [vmem:[%s264 + $0x4] sm:$0xf]
      %v317 = vld [vmem:[%s264 + $0x8] sm:$0xf]
      %v318 = vld [vmem:[%s264 + $0xc] sm:$0xf]
      %v319 = vld [vmem:[%s264 + $0x10] sm:$0xf]
      %v320 = vld [vmem:[%s264 + $0x14] sm:$0xf]
      %v321 = vld [vmem:[%s264 + $0x18] sm:$0xf]
      %v322 = vld [vmem:[%s264 + $0x1c] sm:$0xf]
      %v323 = vld [vmem:[%s264 + $0x20] sm:$0xf]
      %v324 = vld [vmem:[%s264 + $0x24] sm:$0xf]
      %v325 = vld [vmem:[%s264 + $0x28] sm:$0xf]
      %v326 = vld [vmem:[%s264 + $0x2c] sm:$0xf]
      %v327 = vld [vmem:[%s264 + $0x30] sm:$0xf]
      %v328 = vld [vmem:[%s264 + $0x34] sm:$0xf]
      %v329 = vld [vmem:[%s264 + $0x38] sm:$0xf]
      %v330 = vld [vmem:[%s264 + $0x3c] sm:$0xf]
      %v331 = vld [vmem:[%s264 + $0x40] sm:$0xf]
      %v332 = vld [vmem:[%s264 + $0x44] sm:$0xf]
      %v333 = vld [vmem:[#allocation2] sm:$0xff]
      %v334 = vld [vmem:[#allocation2 + $0x8] sm:$0xff]
      %v335 = vld [vmem:[#allocation2 + $0x10] sm:$0xff]
      %v336 = vld [vmem:[#allocation2 + $0x18] sm:$0xff]
      %v337 = vld [vmem:[#allocation2 + $0x20] sm:$0xff]
      %v338 = vld [vmem:[#allocation2 + $0x28] sm:$0xff]
      %v339 = vld [vmem:[#allocation2 + $0x30] sm:$0xff]
      %v340 = vld [vmem:[#allocation2 + $0x38] sm:$0xff]
      %v341 = vld [vmem:[#allocation2 + $0x40] sm:$0xff]
      %v342 = vld [vmem:[#allocation2 + $0x48] sm:$0xff]
      %v343 = vld [vmem:[#allocation2 + $0x50] sm:$0xff]
      %v344 = vld [vmem:[#allocation2 + $0x58] sm:$0xff]
      %v345 = vld [vmem:[#allocation2 + $0x60] sm:$0xff]
      %v346 = vld [vmem:[#allocation2 + $0x68] sm:$0xff]
      %v347 = vld [vmem:[#allocation2 + $0x70] sm:$0xff]
      %v348 = vld [vmem:[#allocation2 + $0x78] sm:$0xff]
      %v349 = vld [vmem:[#allocation2 + $0x80] sm:$0xff]
      %v350 = vld [vmem:[#allocation2 + $0x88] sm:$0xff]
      %s351 = scalar_lea.vmem %s276, 4
      %v352 = vld [vmem:[%s351] sm:$0xf]
      %v371 = vunpack.c.l.b16 %v315
      %v372 = vunpack.c.l.b16 %v316
      %v373 = vunpack.c.l.b16 %v317
      %v374 = vunpack.c.l.b16 %v318
      %v375 = vunpack.c.l.b16 %v319
      %v376 = vunpack.c.l.b16 %v320
      %v377 = vunpack.c.l.b16 %v321
      %v378 = vunpack.c.l.b16 %v322
      %v379 = vunpack.c.l.b16 %v323
      %v380 = vunpack.c.l.b16 %v324
      %v381 = vunpack.c.l.b16 %v325
      %v382 = vunpack.c.l.b16 %v326
      %v383 = vunpack.c.l.b16 %v327
      %v384 = vunpack.c.l.b16 %v328
      %v385 = vunpack.c.l.b16 %v329
      %v386 = vunpack.c.l.b16 %v330
      %v387 = vunpack.c.l.b16 %v331
      %v388 = vunpack.c.l.b16 %v332
      %v389 = vpack.c.b16 %v372, %v371
      %v390 = vpack.c.b16 %v374, %v373
      %v391 = vpack.c.b16 %v376, %v375
      %v392 = vpack.c.b16 %v378, %v377
      %v393 = vpack.c.b16 %v380, %v379
      %v394 = vpack.c.b16 %v382, %v381
      %v395 = vpack.c.b16 %v384, %v383
      %v396 = vpack.c.b16 %v386, %v385
      %v397 = vpack.c.b16 %v388, %v387
      %vm398 = vcmask 64512
      %v400 = vsel %vm398, %v389, 0
      %v403 = vsel %vm398, %v390, 0
      %v406 = vsel %vm398, %v391, 0
      %v409 = vsel %vm398, %v392, 0
      %v412 = vsel %vm398, %v393, 0
      %v415 = vsel %vm398, %v394, 0
      %v418 = vsel %vm398, %v395, 0
      %v421 = vsel %vm398, %v396, 0
      %v424 = vsel %vm398, %v397, 0
      %vm426 = vcmask 1043456
      %v428 = vsel %vm426, %v352, 0
      %430 = vmatprep.subr.bf16.mxu0 0
      %431 = vmatpush1.bf16.msra.mxu0 %v428
      %432 = vmatprep.subr.bf16.mxu0 0
      %433 = vmatpush1.bf16.msra.mxu0 0
      %434 = vmatprep.subr.bf16.mxu0 0
      %435 = vmatpush1.bf16.msra.mxu0 0
      %436 = vmatprep.subr.bf16.mxu0 0
      %437 = vmatpush1.bf16.msra.mxu0 0
      %438 = vmatprep.subr.bf16.mxu0 0
      %439 = vmatpush1.bf16.msra.mxu0 0
      %440 = vmatprep.subr.bf16.mxu0 0
      %441 = vmatpush1.bf16.msra.mxu0 0
      %442 = vmatprep.subr.bf16.mxu0 0
      %443 = vmatpush1.bf16.msra.mxu0 0
      %444 = vmatprep.subr.bf16.mxu0 0
      %445 = vmatpush1.bf16.msra.mxu0 0
      %446 = vmatprep.subr.bf16.mxu0 0
      %447 = vmatpush1.bf16.msra.mxu0 0
      %448 = vmatprep.subr.bf16.mxu0 0
      %449 = vmatpush1.bf16.msra.mxu0 0
      %450 = vmatprep.subr.bf16.mxu0 0
      %451 = vmatpush1.bf16.msra.mxu0 0
      %452 = vmatprep.subr.bf16.mxu0 0
      %453 = vmatpush1.bf16.msra.mxu0 0
      %454 = vmatprep.subr.bf16.mxu0 0
      %455 = vmatpush1.bf16.msra.mxu0 0
      %456 = vmatprep.subr.bf16.mxu0 0
      %457 = vmatpush1.bf16.msra.mxu0 0
      %458 = vmatprep.subr.bf16.mxu0 0
      %459 = vmatpush1.bf16.msra.mxu0 0
      %460 = vmatprep.subr.bf16.mxu0 0
      %461 = vmatpush1.bf16.msra.mxu0 0
      %462 = vmatprep.mubr.bf16.mxu0 0
      %463 = vmatmul.mubr.bf16.gmra.mrb[0].mxu0 %v400
      %v464 = vpop.f32.mrb[0].mxu0
      %v465 = vadd.f32 0.0, %v464
      %v466 = vpop.f32.mrb[0].mxu0
      %v467 = vpop.f32.mrb[0].mxu0
      %v468 = vadd.f32 0.0, %v467
      %v469 = vpop.f32.mrb[0].mxu0
      %470 = vmatprep.mubr.bf16.mxu0 0
      %471 = vmatmul.mubr.bf16.gmra.mrb[0].mxu0 %v403
      %v472 = vpop.f32.mrb[0].mxu0
      %v473 = vadd.f32 0.0, %v472
      %v474 = vpop.f32.mrb[0].mxu0
      %v475 = vpop.f32.mrb[0].mxu0
      %v476 = vadd.f32 0.0, %v475
      %v477 = vpop.f32.mrb[0].mxu0
      %478 = vmatprep.mubr.bf16.mxu0 0
      %479 = vmatmul.mubr.bf16.gmra.mrb[0].mxu0 %v406
      %v480 = vpop.f32.mrb[0].mxu0
      %v481 = vadd.f32 0.0, %v480
      %v482 = vpop.f32.mrb[0].mxu0
      %v483 = vpop.f32.mrb[0].mxu0
      %v484 = vadd.f32 0.0, %v483
      %v485 = vpop.f32.mrb[0].mxu0
      %486 = vmatprep.mubr.bf16.mxu0 0
      %487 = vmatmul.mubr.bf16.gmra.mrb[0].mxu0 %v409
      %v488 = vpop.f32.mrb[0].mxu0
      %v489 = vadd.f32 0.0, %v488
      %v490 = vpop.f32.mrb[0].mxu0
      %v491 = vpop.f32.mrb[0].mxu0
      %v492 = vadd.f32 0.0, %v491
      %v493 = vpop.f32.mrb[0].mxu0
      %494 = vmatprep.mubr.bf16.mxu0 0
      %495 = vmatmul.mubr.bf16.gmra.mrb[0].mxu0 %v412
      %v496 = vpop.f32.mrb[0].mxu0
      %v497 = vadd.f32 0.0, %v496
      %v498 = vpop.f32.mrb[0].mxu0
      %v499 = vpop.f32.mrb[0].mxu0
      %v500 = vadd.f32 0.0, %v499
      %v501 = vpop.f32.mrb[0].mxu0
      %502 = vmatprep.mubr.bf16.mxu0 0
      %503 = vmatmul.mubr.bf16.gmra.mrb[0].mxu0 %v415
      %v504 = vpop.f32.mrb[0].mxu0
      %v505 = vadd.f32 0.0, %v504
      %v506 = vpop.f32.mrb[0].mxu0
      %v507 = vpop.f32.mrb[0].mxu0
      %v508 = vadd.f32 0.0, %v507
      %v509 = vpop.f32.mrb[0].mxu0
      %510 = vmatprep.mubr.bf16.mxu0 0
      %511 = vmatmul.mubr.bf16.gmra.mrb[0].mxu0 %v418
      %v512 = vpop.f32.mrb[0].mxu0
      %v513 = vadd.f32 0.0, %v512
      %v514 = vpop.f32.mrb[0].mxu0
      %v515 = vpop.f32.mrb[0].mxu0
      %v516 = vadd.f32 0.0, %v515
      %v517 = vpop.f32.mrb[0].mxu0
      %518 = vmatprep.mubr.bf16.mxu0 0
      %519 = vmatmul.mubr.bf16.gmra.mrb[0].mxu0 %v421
      %v520 = vpop.f32.mrb[0].mxu0
      %v521 = vadd.f32 0.0, %v520
      %v522 = vpop.f32.mrb[0].mxu0
      %v523 = vpop.f32.mrb[0].mxu0
      %v524 = vadd.f32 0.0, %v523
      %v525 = vpop.f32.mrb[0].mxu0
      %526 = vmatprep.mubr.bf16.mxu0 0
      %527 = vmatmul.mubr.bf16.gmra.mrb[0].mxu0 %v424
      %v528 = vpop.f32.mrb[0].mxu0
      %v529 = vadd.f32 0.0, %v528
      %v530 = vpop.f32.mrb[0].mxu0
      %v531 = vpop.f32.mrb[0].mxu0
      %v532 = vadd.f32 0.0, %v531
      %v533 = vpop.f32.mrb[0].mxu0
      %534 = vdwg.mxu0
      %v535 = vadd.f32 %v333, %v465
      %v536 = vadd.f32 %v334, %v468
      %v537 = vadd.f32 %v335, %v473
      %v538 = vadd.f32 %v336, %v476
      %v539 = vadd.f32 %v337, %v481
      %v540 = vadd.f32 %v338, %v484
      %v541 = vadd.f32 %v339, %v489
      %v542 = vadd.f32 %v340, %v492
      %v543 = vadd.f32 %v341, %v497
      %v544 = vadd.f32 %v342, %v500
      %v545 = vadd.f32 %v343, %v505
      %v546 = vadd.f32 %v344, %v508
      %v547 = vadd.f32 %v345, %v513
      %v548 = vadd.f32 %v346, %v516
      %v549 = vadd.f32 %v347, %v521
      %v550 = vadd.f32 %v348, %v524
      %v551 = vadd.f32 %v349, %v529
      %v552 = vadd.f32 %v350, %v532
      %vm553 = vcmask 130048
      %554 = vst.msk [vmem:[#allocation2] sm:$0xff] %vm553, %v535
      %555 = vst.msk [vmem:[#allocation2 + $0x8] sm:$0xff] %vm553, %v536
      %556 = vst.msk [vmem:[#allocation2 + $0x10] sm:$0xff] %vm553, %v537
      %557 = vst.msk [vmem:[#allocation2 + $0x18] sm:$0xff] %vm553, %v538
      %558 = vst.msk [vmem:[#allocation2 + $0x20] sm:$0xff] %vm553, %v539
      %559 = vst.msk [vmem:[#allocation2 + $0x28] sm:$0xff] %vm553, %v540
      %560 = vst.msk [vmem:[#allocation2 + $0x30] sm:$0xff] %vm553, %v541
      %561 = vst.msk [vmem:[#allocation2 + $0x38] sm:$0xff] %vm553, %v542
      %562 = vst.msk [vmem:[#allocation2 + $0x40] sm:$0xff] %vm553, %v543
      %563 = vst.msk [vmem:[#allocation2 + $0x48] sm:$0xff] %vm553, %v544
      %564 = vst.msk [vmem:[#allocation2 + $0x50] sm:$0xff] %vm553, %v545
      %565 = vst.msk [vmem:[#allocation2 + $0x58] sm:$0xff] %vm553, %v546
      %566 = vst.msk [vmem:[#allocation2 + $0x60] sm:$0xff] %vm553, %v547
      %567 = vst.msk [vmem:[#allocation2 + $0x68] sm:$0xff] %vm553, %v548
      %568 = vst.msk [vmem:[#allocation2 + $0x70] sm:$0xff] %vm553, %v549
      %569 = vst.msk [vmem:[#allocation2 + $0x78] sm:$0xff] %vm553, %v550
      %570 = vst.msk [vmem:[#allocation2 + $0x80] sm:$0xff] %vm553, %v551
      %571 = vst.msk [vmem:[#allocation2 + $0x88] sm:$0xff] %vm553, %v552
      %v572 = vpack.c.b16 %v388, %v388
      %v574 = vshrl.u32 %v572, 16
      %v576 = vrot.slane %v574, 3
      %vm578 = vsmask.f32 256
      %v579 = vshrl.u32 %v389, 16
      %v581 = vrot.slane %v579, 7
      %v582 = vshll.u32 %v389, 16
      %v584 = vor.u32 %v581, %v582
      %v585 = vshrl.u32 %v390, 16
      %v587 = vrot.slane %v585, 7
      %v588 = vshll.u32 %v390, 16
      %v590 = vor.u32 %v587, %v588
      %v591 = vsel %vm578, %v581, %v590
      %v592 = vshrl.u32 %v391, 16
      %v594 = vrot.slane %v592, 7
      %v595 = vshll.u32 %v391, 16
      %v597 = vor.u32 %v594, %v595
      %v598 = vsel %vm578, %v587, %v597
      %v599 = vshrl.u32 %v392, 16
      %v601 = vrot.slane %v599, 7
      %v602 = vshll.u32 %v392, 16
      %v604 = vor.u32 %v601, %v602
      %v605 = vsel %vm578, %v594, %v604
      %v606 = vshrl.u32 %v393, 16
      %v608 = vrot.slane %v606, 7
      %v609 = vshll.u32 %v393, 16
      %v611 = vor.u32 %v608, %v609
      %v612 = vsel %vm578, %v601, %v611
      %v613 = vshrl.u32 %v394, 16
      %v615 = vrot.slane %v613, 7
      %v616 = vshll.u32 %v394, 16
      %v618 = vor.u32 %v615, %v616
      %v619 = vsel %vm578, %v608, %v618
      %v620 = vshrl.u32 %v395, 16
      %v622 = vrot.slane %v620, 7
      %v623 = vshll.u32 %v395, 16
      %v625 = vor.u32 %v622, %v623
      %v626 = vsel %vm578, %v615, %v625
      %v627 = vshrl.u32 %v396, 16
      %v629 = vrot.slane %v627, 7
      %v630 = vshll.u32 %v396, 16
      %v632 = vor.u32 %v629, %v630
      %v633 = vsel %vm578, %v622, %v632
      %v634 = vshrl.u32 %v397, 16
      %v636 = vrot.slane %v634, 7
      %v637 = vshll.u32 %v397, 16
      %v639 = vor.u32 %v636, %v637
      %v640 = vsel %vm578, %v629, %v639
      %vm642 = vcmask 1040384
      %vm643 = vmand %vm642, %vm578
      %v644 = vsel %vm643, %v576, %v584
      %v645 = vld [vmem:[#allocation2] sm:$0xff]
      %v646 = vld [vmem:[#allocation2 + $0x8] sm:$0xff]
      %v647 = vld [vmem:[#allocation2 + $0x10] sm:$0xff]
      %v648 = vld [vmem:[#allocation2 + $0x18] sm:$0xff]
      %v649 = vld [vmem:[#allocation2 + $0x20] sm:$0xff]
      %v650 = vld [vmem:[#allocation2 + $0x28] sm:$0xff]
      %v651 = vld [vmem:[#allocation2 + $0x30] sm:$0xff]
      %v652 = vld [vmem:[#allocation2 + $0x38] sm:$0xff]
      %v653 = vld [vmem:[#allocation2 + $0x40] sm:$0xff]
      %v654 = vld [vmem:[#allocation2 + $0x48] sm:$0xff]
      %v655 = vld [vmem:[#allocation2 + $0x50] sm:$0xff]
      %v656 = vld [vmem:[#allocation2 + $0x58] sm:$0xff]
      %v657 = vld [vmem:[#allocation2 + $0x60] sm:$0xff]
      %v658 = vld [vmem:[#allocation2 + $0x68] sm:$0xff]
      %v659 = vld [vmem:[#allocation2 + $0x70] sm:$0xff]
      %v660 = vld [vmem:[#allocation2 + $0x78] sm:$0xff]
      %v661 = vld [vmem:[#allocation2 + $0x80] sm:$0xff]
      %v662 = vld [vmem:[#allocation2 + $0x88] sm:$0xff]
      %v663 = vld [vmem:[%s276] sm:$0xf]
      %v665 = vsel %vm398, %v644, 0
      %v668 = vsel %vm398, %v591, 0
      %v671 = vsel %vm398, %v598, 0
      %v674 = vsel %vm398, %v605, 0
      %v677 = vsel %vm398, %v612, 0
      %v680 = vsel %vm398, %v619, 0
      %v683 = vsel %vm398, %v626, 0
      %v686 = vsel %vm398, %v633, 0
      %v689 = vsel %vm398, %v640, 0
      %v692 = vsel %vm426, %v663, 0
      %694 = vmatprep.subr.bf16.mxu0 0
      %695 = vmatpush1.bf16.msra.mxu0 %v692
      %696 = vmatprep.subr.bf16.mxu0 0
      %697 = vmatpush1.bf16.msra.mxu0 0
      %698 = vmatprep.subr.bf16.mxu0 0
      %699 = vmatpush1.bf16.msra.mxu0 0
      %700 = vmatprep.subr.bf16.mxu0 0
      %701 = vmatpush1.bf16.msra.mxu0 0
      %702 = vmatprep.subr.bf16.mxu0 0
      %703 = vmatpush1.bf16.msra.mxu0 0
      %704 = vmatprep.subr.bf16.mxu0 0
      %705 = vmatpush1.bf16.msra.mxu0 0
      %706 = vmatprep.subr.bf16.mxu0 0
      %707 = vmatpush1.bf16.msra.mxu0 0
      %708 = vmatprep.subr.bf16.mxu0 0
      %709 = vmatpush1.bf16.msra.mxu0 0
      %710 = vmatprep.subr.bf16.mxu0 0
      %711 = vmatpush1.bf16.msra.mxu0 0
      %712 = vmatprep.subr.bf16.mxu0 0
      %713 = vmatpush1.bf16.msra.mxu0 0
      %714 = vmatprep.subr.bf16.mxu0 0
      %715 = vmatpush1.bf16.msra.mxu0 0
      %716 = vmatprep.subr.bf16.mxu0 0
      %717 = vmatpush1.bf16.msra.mxu0 0
      %718 = vmatprep.subr.bf16.mxu0 0
      %719 = vmatpush1.bf16.msra.mxu0 0
      %720 = vmatprep.subr.bf16.mxu0 0
      %721 = vmatpush1.bf16.msra.mxu0 0
      %722 = vmatprep.subr.bf16.mxu0 0
      %723 = vmatpush1.bf16.msra.mxu0 0
      %724 = vmatprep.subr.bf16.mxu0 0
      %725 = vmatpush1.bf16.msra.mxu0 0
      %726 = vmatprep.mubr.bf16.mxu0 0
      %727 = vmatmul.mubr.bf16.gmra.mrb[0].mxu0 %v665
      %v728 = vpop.f32.mrb[0].mxu0
      %v729 = vadd.f32 0.0, %v728
      %v730 = vpop.f32.mrb[0].mxu0
      %v731 = vpop.f32.mrb[0].mxu0
      %v732 = vadd.f32 0.0, %v731
      %v733 = vpop.f32.mrb[0].mxu0
      %734 = vmatprep.mubr.bf16.mxu0 0
      %735 = vmatmul.mubr.bf16.gmra.mrb[0].mxu0 %v668
      %v736 = vpop.f32.mrb[0].mxu0
      %v737 = vadd.f32 0.0, %v736
      %v738 = vpop.f32.mrb[0].mxu0
      %v739 = vpop.f32.mrb[0].mxu0
      %v740 = vadd.f32 0.0, %v739
      %v741 = vpop.f32.mrb[0].mxu0
      %742 = vmatprep.mubr.bf16.mxu0 0
      %743 = vmatmul.mubr.bf16.gmra.mrb[0].mxu0 %v671
      %v744 = vpop.f32.mrb[0].mxu0
      %v745 = vadd.f32 0.0, %v744
      %v746 = vpop.f32.mrb[0].mxu0
      %v747 = vpop.f32.mrb[0].mxu0
      %v748 = vadd.f32 0.0, %v747
      %v749 = vpop.f32.mrb[0].mxu0
      %750 = vmatprep.mubr.bf16.mxu0 0
      %751 = vmatmul.mubr.bf16.gmra.mrb[0].mxu0 %v674
      %v752 = vpop.f32.mrb[0].mxu0
      %v753 = vadd.f32 0.0, %v752
      %v754 = vpop.f32.mrb[0].mxu0
      %v755 = vpop.f32.mrb[0].mxu0
      %v756 = vadd.f32 0.0, %v755
      %v757 = vpop.f32.mrb[0].mxu0
      %758 = vmatprep.mubr.bf16.mxu0 0
      %759 = vmatmul.mubr.bf16.gmra.mrb[0].mxu0 %v677
      %v760 = vpop.f32.mrb[0].mxu0
      %v761 = vadd.f32 0.0, %v760
      %v762 = vpop.f32.mrb[0].mxu0
      %v763 = vpop.f32.mrb[0].mxu0
      %v764 = vadd.f32 0.0, %v763
      %v765 = vpop.f32.mrb[0].mxu0
      %766 = vmatprep.mubr.bf16.mxu0 0
      %767 = vmatmul.mubr.bf16.gmra.mrb[0].mxu0 %v680
      %v768 = vpop.f32.mrb[0].mxu0
      %v769 = vadd.f32 0.0, %v768
      %v770 = vpop.f32.mrb[0].mxu0
      %v771 = vpop.f32.mrb[0].mxu0
      %v772 = vadd.f32 0.0, %v771
      %v773 = vpop.f32.mrb[0].mxu0
      %774 = vmatprep.mubr.bf16.mxu0 0
      %775 = vmatmul.mubr.bf16.gmra.mrb[0].mxu0 %v683
      %v776 = vpop.f32.mrb[0].mxu0
      %v777 = vadd.f32 0.0, %v776
      %v778 = vpop.f32.mrb[0].mxu0
      %v779 = vpop.f32.mrb[0].mxu0
      %v780 = vadd.f32 0.0, %v779
      %v781 = vpop.f32.mrb[0].mxu0
      %782 = vmatprep.mubr.bf16.mxu0 0
      %783 = vmatmul.mubr.bf16.gmra.mrb[0].mxu0 %v686
      %v784 = vpop.f32.mrb[0].mxu0
      %v785 = vadd.f32 0.0, %v784
      %v786 = vpop.f32.mrb[0].mxu0
      %v787 = vpop.f32.mrb[0].mxu0
      %v788 = vadd.f32 0.0, %v787
      %v789 = vpop.f32.mrb[0].mxu0
      %790 = vmatprep.mubr.bf16.mxu0 0
      %791 = vmatmul.mubr.bf16.gmra.mrb[0].mxu0 %v689
      %v792 = vpop.f32.mrb[0].mxu0
      %v793 = vadd.f32 0.0, %v792
      %v794 = vpop.f32.mrb[0].mxu0
      %v795 = vpop.f32.mrb[0].mxu0
      %v796 = vadd.f32 0.0, %v795
      %v797 = vpop.f32.mrb[0].mxu0
      %798 = vdwg.mxu0
      %v799 = vadd.f32 %v645, %v729
      %v800 = vadd.f32 %v646, %v732
      %v801 = vadd.f32 %v647, %v737
      %v802 = vadd.f32 %v648, %v740
      %v803 = vadd.f32 %v649, %v745
      %v804 = vadd.f32 %v650, %v748
      %v805 = vadd.f32 %v651, %v753
      %v806 = vadd.f32 %v652, %v756
      %v807 = vadd.f32 %v653, %v761
      %v808 = vadd.f32 %v654, %v764
      %v809 = vadd.f32 %v655, %v769
      %v810 = vadd.f32 %v656, %v772
      %v811 = vadd.f32 %v657, %v777
      %v812 = vadd.f32 %v658, %v780
      %v813 = vadd.f32 %v659, %v785
      %v814 = vadd.f32 %v660, %v788
      %v815 = vadd.f32 %v661, %v793
      %v816 = vadd.f32 %v662, %v796
      %817 = vst.msk [vmem:[#allocation2] sm:$0xff] %vm553, %v799
      %818 = vst.msk [vmem:[#allocation2 + $0x8] sm:$0xff] %vm553, %v800
      %819 = vst.msk [vmem:[#allocation2 + $0x10] sm:$0xff] %vm553, %v801
      %820 = vst.msk [vmem:[#allocation2 + $0x18] sm:$0xff] %vm553, %v802
      %821 = vst.msk [vmem:[#allocation2 + $0x20] sm:$0xff] %vm553, %v803
      %822 = vst.msk [vmem:[#allocation2 + $0x28] sm:$0xff] %vm553, %v804
      %823 = vst.msk [vmem:[#allocation2 + $0x30] sm:$0xff] %vm553, %v805
      %824 = vst.msk [vmem:[#allocation2 + $0x38] sm:$0xff] %vm553, %v806
      %825 = vst.msk [vmem:[#allocation2 + $0x40] sm:$0xff] %vm553, %v807
      %826 = vst.msk [vmem:[#allocation2 + $0x48] sm:$0xff] %vm553, %v808
      %827 = vst.msk [vmem:[#allocation2 + $0x50] sm:$0xff] %vm553, %v809
      %828 = vst.msk [vmem:[#allocation2 + $0x58] sm:$0xff] %vm553, %v810
      %829 = vst.msk [vmem:[#allocation2 + $0x60] sm:$0xff] %vm553, %v811
      %830 = vst.msk [vmem:[#allocation2 + $0x68] sm:$0xff] %vm553, %v812
      %831 = vst.msk [vmem:[#allocation2 + $0x70] sm:$0xff] %vm553, %v813
      %832 = vst.msk [vmem:[#allocation2 + $0x78] sm:$0xff] %vm553, %v814
      %833 = vst.msk [vmem:[#allocation2 + $0x80] sm:$0xff] %vm553, %v815
      %834 = vst.msk [vmem:[#allocation2 + $0x88] sm:$0xff] %vm553, %v816
      %vm835 = vsmask.f32 7424
      %v836 = vrot.slane %v582, 1
      %v837 = vor.u32 %v579, %v836
      %v838 = vrot.slane %v588, 1
      %v839 = vsel %vm835, %v837, %v838
      %v840 = vor.u32 %v585, %v838
      %v841 = vrot.slane %v595, 1
      %v842 = vsel %vm835, %v840, %v841
      %v843 = vor.u32 %v592, %v841
      %v844 = vrot.slane %v602, 1
      %v845 = vsel %vm835, %v843, %v844
      %v846 = vor.u32 %v599, %v844
      %v847 = vrot.slane %v609, 1
      %v848 = vsel %vm835, %v846, %v847
      %v849 = vor.u32 %v606, %v847
      %v850 = vrot.slane %v616, 1
      %v851 = vsel %vm835, %v849, %v850
      %v852 = vor.u32 %v613, %v850
      %v853 = vrot.slane %v623, 1
      %v854 = vsel %vm835, %v852, %v853
      %v855 = vor.u32 %v620, %v853
      %v856 = vrot.slane %v630, 1
      %v857 = vsel %vm835, %v855, %v856
      %v858 = vor.u32 %v627, %v856
      %v859 = vrot.slane %v637, 1
      %v860 = vsel %vm835, %v858, %v859
      %v861 = vor.u32 %v634, %v859
      %v863 = vpack.c.b16 %v371, %v371
      %v865 = vshll.u32 %v863, 16
      %v867 = vrot.slane %v865, 1
      %vm869 = vcmask 1047552
      %vm870 = vmand %vm869, %vm835
      %v871 = vsel %vm870, %v861, %v867
      %v872 = vld [vmem:[#allocation2] sm:$0xff]
      %v873 = vld [vmem:[#allocation2 + $0x8] sm:$0xff]
      %v874 = vld [vmem:[#allocation2 + $0x10] sm:$0xff]
      %v875 = vld [vmem:[#allocation2 + $0x18] sm:$0xff]
      %v876 = vld [vmem:[#allocation2 + $0x20] sm:$0xff]
      %v877 = vld [vmem:[#allocation2 + $0x28] sm:$0xff]
      %v878 = vld [vmem:[#allocation2 + $0x30] sm:$0xff]
      %v879 = vld [vmem:[#allocation2 + $0x38] sm:$0xff]
      %v880 = vld [vmem:[#allocation2 + $0x40] sm:$0xff]
      %v881 = vld [vmem:[#allocation2 + $0x48] sm:$0xff]
      %v882 = vld [vmem:[#allocation2 + $0x50] sm:$0xff]
      %v883 = vld [vmem:[#allocation2 + $0x58] sm:$0xff]
      %v884 = vld [vmem:[#allocation2 + $0x60] sm:$0xff]
      %v885 = vld [vmem:[#allocation2 + $0x68] sm:$0xff]
      %v886 = vld [vmem:[#allocation2 + $0x70] sm:$0xff]
      %v887 = vld [vmem:[#allocation2 + $0x78] sm:$0xff]
      %v888 = vld [vmem:[#allocation2 + $0x80] sm:$0xff]
      %v889 = vld [vmem:[#allocation2 + $0x88] sm:$0xff]
      %s890 = scalar_lea.vmem %s276, 8
      %v891 = vld [vmem:[%s890] sm:$0xf]
      %v893 = vsel %vm398, %v839, 0
      %v896 = vsel %vm398, %v842, 0
      %v899 = vsel %vm398, %v845, 0
      %v902 = vsel %vm398, %v848, 0
      %v905 = vsel %vm398, %v851, 0
      %v908 = vsel %vm398, %v854, 0
      %v911 = vsel %vm398, %v857, 0
      %v914 = vsel %vm398, %v860, 0
      %v917 = vsel %vm398, %v871, 0
      %v920 = vsel %vm426, %v891, 0
      %922 = vmatprep.subr.bf16.mxu0 0
      %923 = vmatpush1.bf16.msra.mxu0 %v920
      %924 = vmatprep.subr.bf16.mxu0 0
      %925 = vmatpush1.bf16.msra.mxu0 0
      %926 = vmatprep.subr.bf16.mxu0 0
      %927 = vmatpush1.bf16.msra.mxu0 0
      %928 = vmatprep.subr.bf16.mxu0 0
      %929 = vmatpush1.bf16.msra.mxu0 0
      %930 = vmatprep.subr.bf16.mxu0 0
      %931 = vmatpush1.bf16.msra.mxu0 0
      %932 = vmatprep.subr.bf16.mxu0 0
      %933 = vmatpush1.bf16.msra.mxu0 0
      %934 = vmatprep.subr.bf16.mxu0 0
      %935 = vmatpush1.bf16.msra.mxu0 0
      %936 = vmatprep.subr.bf16.mxu0 0
      %937 = vmatpush1.bf16.msra.mxu0 0
      %938 = vmatprep.subr.bf16.mxu0 0
      %939 = vmatpush1.bf16.msra.mxu0 0
      %940 = vmatprep.subr.bf16.mxu0 0
      %941 = vmatpush1.bf16.msra.mxu0 0
      %942 = vmatprep.subr.bf16.mxu0 0
      %943 = vmatpush1.bf16.msra.mxu0 0
      %944 = vmatprep.subr.bf16.mxu0 0
      %945 = vmatpush1.bf16.msra.mxu0 0
      %946 = vmatprep.subr.bf16.mxu0 0
      %947 = vmatpush1.bf16.msra.mxu0 0
      %948 = vmatprep.subr.bf16.mxu0 0
      %949 = vmatpush1.bf16.msra.mxu0 0
      %950 = vmatprep.subr.bf16.mxu0 0
      %951 = vmatpush1.bf16.msra.mxu0 0
      %952 = vmatprep.subr.bf16.mxu0 0
      %953 = vmatpush1.bf16.msra.mxu0 0
      %954 = vmatprep.mubr.bf16.mxu0 0
      %955 = vmatmul.mubr.bf16.gmra.mrb[0].mxu0 %v893
      %v956 = vpop.f32.mrb[0].mxu0
      %v957 = vadd.f32 0.0, %v956
      %v958 = vpop.f32.mrb[0].mxu0
      %v959 = vpop.f32.mrb[0].mxu0
      %v960 = vadd.f32 0.0, %v959
      %v961 = vpop.f32.mrb[0].mxu0
      %962 = vmatprep.mubr.bf16.mxu0 0
      %963 = vmatmul.mubr.bf16.gmra.mrb[0].mxu0 %v896
      %v964 = vpop.f32.mrb[0].mxu0
      %v965 = vadd.f32 0.0, %v964
      %v966 = vpop.f32.mrb[0].mxu0
      %v967 = vpop.f32.mrb[0].mxu0
      %v968 = vadd.f32 0.0, %v967
      %v969 = vpop.f32.mrb[0].mxu0
      %970 = vmatprep.mubr.bf16.mxu0 0
      %971 = vmatmul.mubr.bf16.gmra.mrb[0].mxu0 %v899
      %v972 = vpop.f32.mrb[0].mxu0
      %v973 = vadd.f32 0.0, %v972
      %v974 = vpop.f32.mrb[0].mxu0
      %v975 = vpop.f32.mrb[0].mxu0
      %v976 = vadd.f32 0.0, %v975
      %v977 = vpop.f32.mrb[0].mxu0
      %978 = vmatprep.mubr.bf16.mxu0 0
      %979 = vmatmul.mubr.bf16.gmra.mrb[0].mxu0 %v902
      %v980 = vpop.f32.mrb[0].mxu0
      %v981 = vadd.f32 0.0, %v980
      %v982 = vpop.f32.mrb[0].mxu0
      %v983 = vpop.f32.mrb[0].mxu0
      %v984 = vadd.f32 0.0, %v983
      %v985 = vpop.f32.mrb[0].mxu0
      %986 = vmatprep.mubr.bf16.mxu0 0
      %987 = vmatmul.mubr.bf16.gmra.mrb[0].mxu0 %v905
      %v988 = vpop.f32.mrb[0].mxu0
      %v989 = vadd.f32 0.0, %v988
      %v990 = vpop.f32.mrb[0].mxu0
      %v991 = vpop.f32.mrb[0].mxu0
      %v992 = vadd.f32 0.0, %v991
      %v993 = vpop.f32.mrb[0].mxu0
      %994 = vmatprep.mubr.bf16.mxu0 0
      %995 = vmatmul.mubr.bf16.gmra.mrb[0].mxu0 %v908
      %v996 = vpop.f32.mrb[0].mxu0
      %v997 = vadd.f32 0.0, %v996
      %v998 = vpop.f32.mrb[0].mxu0
      %v999 = vpop.f32.mrb[0].mxu0
      %v1000 = vadd.f32 0.0, %v999
      %v1001 = vpop.f32.mrb[0].mxu0
      %1002 = vmatprep.mubr.bf16.mxu0 0
      %1003 = vmatmul.mubr.bf16.gmra.mrb[0].mxu0 %v911
      %v1004 = vpop.f32.mrb[0].mxu0
      %v1005 = vadd.f32 0.0, %v1004
      %v1006 = vpop.f32.mrb[0].mxu0
      %v1007 = vpop.f32.mrb[0].mxu0
      %v1008 = vadd.f32 0.0, %v1007
      %v1009 = vpop.f32.mrb[0].mxu0
      %1010 = vmatprep.mubr.bf16.mxu0 0
      %1011 = vmatmul.mubr.bf16.gmra.mrb[0].mxu0 %v914
      %v1012 = vpop.f32.mrb[0].mxu0
      %v1013 = vadd.f32 0.0, %v1012
      %v1014 = vpop.f32.mrb[0].mxu0
      %v1015 = vpop.f32.mrb[0].mxu0
      %v1016 = vadd.f32 0.0, %v1015
      %v1017 = vpop.f32.mrb[0].mxu0
      %1018 = vmatprep.mubr.bf16.mxu0 0
      %1019 = vmatmul.mubr.bf16.gmra.mrb[0].mxu0 %v917
      %v1020 = vpop.f32.mrb[0].mxu0
      %v1021 = vadd.f32 0.0, %v1020
      %v1022 = vpop.f32.mrb[0].mxu0
      %v1023 = vpop.f32.mrb[0].mxu0
      %v1024 = vadd.f32 0.0, %v1023
      %v1025 = vpop.f32.mrb[0].mxu0
      %1026 = vdwg.mxu0
      %v1027 = vadd.f32 %v872, %v957
      %v1028 = vadd.f32 %v873, %v960
      %v1029 = vadd.f32 %v874, %v965
      %v1030 = vadd.f32 %v875, %v968
      %v1031 = vadd.f32 %v876, %v973
      %v1032 = vadd.f32 %v877, %v976
      %v1033 = vadd.f32 %v878, %v981
      %v1034 = vadd.f32 %v879, %v984
      %v1035 = vadd.f32 %v880, %v989
      %v1036 = vadd.f32 %v881, %v992
      %v1037 = vadd.f32 %v882, %v997
      %v1038 = vadd.f32 %v883, %v1000
      %v1039 = vadd.f32 %v884, %v1005
      %v1040 = vadd.f32 %v885, %v1008
      %v1041 = vadd.f32 %v886, %v1013
      %v1042 = vadd.f32 %v887, %v1016
      %v1043 = vadd.f32 %v888, %v1021
      %v1044 = vadd.f32 %v889, %v1024
      %1045 = vst.msk [vmem:[#allocation2] sm:$0xff] %vm553, %v1027
      %1046 = vst.msk [vmem:[#allocation2 + $0x8] sm:$0xff] %vm553, %v1028
      %1047 = vst.msk [vmem:[#allocation2 + $0x10] sm:$0xff] %vm553, %v1029
      %1048 = vst.msk [vmem:[#allocation2 + $0x18] sm:$0xff] %vm553, %v1030
      %1049 = vst.msk [vmem:[#allocation2 + $0x20] sm:$0xff] %vm553, %v1031
      %1050 = vst.msk [vmem:[#allocation2 + $0x28] sm:$0xff] %vm553, %v1032
      %1051 = vst.msk [vmem:[#allocation2 + $0x30] sm:$0xff] %vm553, %v1033
      %1052 = vst.msk [vmem:[#allocation2 + $0x38] sm:$0xff] %vm553, %v1034
      %1053 = vst.msk [vmem:[#allocation2 + $0x40] sm:$0xff] %vm553, %v1035
      %1054 = vst.msk [vmem:[#allocation2 + $0x48] sm:$0xff] %vm553, %v1036
      %1055 = vst.msk [vmem:[#allocation2 + $0x50] sm:$0xff] %vm553, %v1037
      %1056 = vst.msk [vmem:[#allocation2 + $0x58] sm:$0xff] %vm553, %v1038
      %1057 = vst.msk [vmem:[#allocation2 + $0x60] sm:$0xff] %vm553, %v1039
      %1058 = vst.msk [vmem:[#allocation2 + $0x68] sm:$0xff] %vm553, %v1040
      %1059 = vst.msk [vmem:[#allocation2 + $0x70] sm:$0xff] %vm553, %v1041
      %1060 = vst.msk [vmem:[#allocation2 + $0x78] sm:$0xff] %vm553, %v1042
      %1061 = vst.msk [vmem:[#allocation2 + $0x80] sm:$0xff] %vm553, %v1043
      %1062 = vst.msk [vmem:[#allocation2 + $0x88] sm:$0xff] %vm553, %v1044
      %p1063 = scmp.eq.s32.totalorder %s22, 2
      %p1064 = pnand %p1063, %p291
      %p1065 = pneg %p1064
      // Predicated region
      $region37: #{tpu_custom_call.1} parent=31 // pred_check
        _
      $region38: #{tpu_custom_call.1} parent=31 // pred_check_branch
        %1067 = sbr.rel (%p1064) target = $region40
      $region39: #{tpu_custom_call.1} parent=31 // pred_region
        %v1068 = vld [vmem:[#allocation2] sm:$0xff]
        %v1069 = vld [vmem:[#allocation2 + $0x8] sm:$0xff]
        %v1070 = vld [vmem:[#allocation2 + $0x10] sm:$0xff]
        %v1071 = vld [vmem:[#allocation2 + $0x18] sm:$0xff]
        %v1072 = vld [vmem:[#allocation2 + $0x20] sm:$0xff]
        %v1073 = vld [vmem:[#allocation2 + $0x28] sm:$0xff]
        %v1074 = vld [vmem:[#allocation2 + $0x30] sm:$0xff]
        %v1075 = vld [vmem:[#allocation2 + $0x38] sm:$0xff]
        %v1076 = vld [vmem:[#allocation2 + $0x40] sm:$0xff]
        %v1077 = vld [vmem:[#allocation2 + $0x48] sm:$0xff]
        %v1078 = vld [vmem:[#allocation2 + $0x50] sm:$0xff]
        %v1079 = vld [vmem:[#allocation2 + $0x58] sm:$0xff]
        %v1080 = vld [vmem:[#allocation2 + $0x60] sm:$0xff]
        %v1081 = vld [vmem:[#allocation2 + $0x68] sm:$0xff]
        %v1082 = vld [vmem:[#allocation2 + $0x70] sm:$0xff]
        %v1083 = vld [vmem:[#allocation2 + $0x78] sm:$0xff]
        %v1084 = vld [vmem:[#allocation2 + $0x80] sm:$0xff]
        %v1085 = vld [vmem:[#allocation2 + $0x88] sm:$0xff]
        %v1086 = vld [vmem:[%s279] sm:$0x1]
        %v1088 = vlaneseq
        %v1089 = vshrl.u32 %v1088, 7
        %v1090 = vsub.s32 0, %v1089
        %v1091 = vrot.slane %v1086, %v1090
        %v1093 = vadd.f32 %v1068, %v1091
        %v1094 = vadd.f32 %v1069, %v1091
        %v1095 = vadd.f32 %v1070, %v1091
        %v1096 = vadd.f32 %v1071, %v1091
        %v1097 = vadd.f32 %v1072, %v1091
        %v1098 = vadd.f32 %v1073, %v1091
        %v1099 = vadd.f32 %v1074, %v1091
        %v1100 = vadd.f32 %v1075, %v1091
        %v1101 = vadd.f32 %v1076, %v1091
        %v1102 = vadd.f32 %v1077, %v1091
        %v1103 = vadd.f32 %v1078, %v1091
        %v1104 = vadd.f32 %v1079, %v1091
        %v1105 = vadd.f32 %v1080, %v1091
        %v1106 = vadd.f32 %v1081, %v1091
        %v1107 = vadd.f32 %v1082, %v1091
        %v1108 = vadd.f32 %v1083, %v1091
        %v1109 = vadd.f32 %v1084, %v1091
        %v1110 = vadd.f32 %v1085, %v1091
        %v1111 = vmax.f32 %v1093, 0.0
        %v1112 = vmax.f32 %v1094, 0.0
        %v1113 = vmax.f32 %v1095, 0.0
        %v1114 = vmax.f32 %v1096, 0.0
        %v1115 = vmax.f32 %v1097, 0.0
        %v1116 = vmax.f32 %v1098, 0.0
        %v1117 = vmax.f32 %v1099, 0.0
        %v1118 = vmax.f32 %v1100, 0.0
        %v1119 = vmax.f32 %v1101, 0.0
        %v1120 = vmax.f32 %v1102, 0.0
        %v1121 = vmax.f32 %v1103, 0.0
        %v1122 = vmax.f32 %v1104, 0.0
        %v1123 = vmax.f32 %v1105, 0.0
        %v1124 = vmax.f32 %v1106, 0.0
        %v1125 = vmax.f32 %v1107, 0.0
        %v1126 = vmax.f32 %v1108, 0.0
        %v1127 = vmax.f32 %v1109, 0.0
        %v1128 = vmax.f32 %v1110, 0.0
        %v1129 = vpack.c.bf16 %v1112, %v1111
        %v1130 = vpack.c.bf16 %v1114, %v1113
        %v1131 = vpack.c.bf16 %v1116, %v1115
        %v1132 = vpack.c.bf16 %v1118, %v1117
        %v1133 = vpack.c.bf16 %v1120, %v1119
        %v1134 = vpack.c.bf16 %v1122, %v1121
        %v1135 = vpack.c.bf16 %v1124, %v1123
        %v1136 = vpack.c.bf16 %v1126, %v1125
        %v1137 = vpack.c.bf16 %v1128, %v1127
        %v1147 = vunpack.c.l.b16 %v1129
        %v1148 = vunpack.c.h.b16 %v1129
        %v1149 = vunpack.c.l.b16 %v1130
        %v1150 = vunpack.c.h.b16 %v1130
        %v1151 = vunpack.c.l.b16 %v1131
        %v1152 = vunpack.c.h.b16 %v1131
        %v1153 = vunpack.c.l.b16 %v1132
        %v1154 = vunpack.c.h.b16 %v1132
        %v1155 = vunpack.c.l.b16 %v1133
        %v1156 = vunpack.c.h.b16 %v1133
        %v1157 = vunpack.c.l.b16 %v1134
        %v1158 = vunpack.c.h.b16 %v1134
        %v1159 = vunpack.c.l.b16 %v1135
        %v1160 = vunpack.c.h.b16 %v1135
        %v1161 = vunpack.c.l.b16 %v1136
        %v1162 = vunpack.c.h.b16 %v1136
        %v1163 = vunpack.c.l.b16 %v1137
        %v1164 = vunpack.c.h.b16 %v1137
        %v1165 = vpack.c.b16 %v1147, %v1147
        %v1166 = vpack.c.b16 %v1148, %v1148
        %v1167 = vpack.c.b16 %v1149, %v1149
        %v1168 = vpack.c.b16 %v1150, %v1150
        %v1169 = vpack.c.b16 %v1151, %v1151
        %v1170 = vpack.c.b16 %v1152, %v1152
        %v1171 = vpack.c.b16 %v1153, %v1153
        %v1172 = vpack.c.b16 %v1154, %v1154
        %v1173 = vpack.c.b16 %v1155, %v1155
        %v1174 = vpack.c.b16 %v1156, %v1156
        %v1175 = vpack.c.b16 %v1157, %v1157
        %v1176 = vpack.c.b16 %v1158, %v1158
        %v1177 = vpack.c.b16 %v1159, %v1159
        %v1178 = vpack.c.b16 %v1160, %v1160
        %v1179 = vpack.c.b16 %v1161, %v1161
        %v1180 = vpack.c.b16 %v1162, %v1162
        %v1181 = vpack.c.b16 %v1163, %v1163
        %v1182 = vpack.c.b16 %v1164, %v1164
        %vm1201 = vcmask 125952
        %1202 = vst.msk [vmem:[%s287] sm:$0xf] %vm1201, %v1165
        %1203 = vst.msk [vmem:[%s287 + $0x4] sm:$0xf] %vm1201, %v1166
        %1204 = vst.msk [vmem:[%s287 + $0x8] sm:$0xf] %vm1201, %v1167
        %1205 = vst.msk [vmem:[%s287 + $0xc] sm:$0xf] %vm1201, %v1168
        %1206 = vst.msk [vmem:[%s287 + $0x10] sm:$0xf] %vm1201, %v1169
        %1207 = vst.msk [vmem:[%s287 + $0x14] sm:$0xf] %vm1201, %v1170
        %1208 = vst.msk [vmem:[%s287 + $0x18] sm:$0xf] %vm1201, %v1171
        %1209 = vst.msk [vmem:[%s287 + $0x1c] sm:$0xf] %vm1201, %v1172
        %1210 = vst.msk [vmem:[%s287 + $0x20] sm:$0xf] %vm1201, %v1173
        %1211 = vst.msk [vmem:[%s287 + $0x24] sm:$0xf] %vm1201, %v1174
        %1212 = vst.msk [vmem:[%s287 + $0x28] sm:$0xf] %vm1201, %v1175
        %1213 = vst.msk [vmem:[%s287 + $0x2c] sm:$0xf] %vm1201, %v1176
        %1214 = vst.msk [vmem:[%s287 + $0x30] sm:$0xf] %vm1201, %v1177
        %1215 = vst.msk [vmem:[%s287 + $0x34] sm:$0xf] %vm1201, %v1178
        %1216 = vst.msk [vmem:[%s287 + $0x38] sm:$0xf] %vm1201, %v1179
        %1217 = vst.msk [vmem:[%s287 + $0x3c] sm:$0xf] %vm1201, %v1180
        %1218 = vst.msk [vmem:[%s287 + $0x40] sm:$0xf] %vm1201, %v1181
        %1219 = vst.msk [vmem:[%s287 + $0x44] sm:$0xf] %vm1201, %v1182
      $region40: #{tpu_custom_call.1} parent=31 // pred_fallthru
        _
      %s1220 = smul.u32 18, %s20
      %p1221 = scmp.lt.s32.totalorder %s1220, 35
      %s1222 = scalar_select %p1221, %s1220, 35
      %p1223 = scmp.lt.s32.totalorder %s21, 0
      %s1224 = scalar_select %p1223, %s21, 0
      %s1225 = sadd.s32 %s1224, %s1222
      %s1226 = smul.addr %s1225, 4
      %s1227 = scalar_lea.vmem %s3, %s1226
      // Predicated region
      $region41: #{tpu_custom_call.1} parent=31 // pred_check
        %p1228 = pneg %p146
      $region42: #{tpu_custom_call.1} parent=31 // pred_check_branch
        %1230 = sbr.rel (%p1228) target = $region44
      $region43: #{tpu_custom_call.1} parent=31 // pred_region
        %s1231 = smul.u32 18, %s20
      $region44: #{tpu_custom_call.1} parent=31 // pred_fallthru
        _
    $region32: #{tpu_custom_call.1} parent=5 // pred_fallthru
      _
    %p1232 = scmp.le.s32.totalorder 2, %s9
    // Predicated region
    $region45: #{tpu_custom_call.1} parent=5 // pred_check
      %p1233 = pneg %p1232
    $region46: #{tpu_custom_call.1} parent=5 // pred_check_branch
      %1235 = sbr.rel (%p1233) target = $region48
    $region47: #{tpu_custom_call.1} parent=5 // pred_region
      %s1236 = ssub.s32 %s9, 2
      // Predicated region
      $region49: #{tpu_custom_call.1} parent=47 // pred_check
        %p1237 = pneg %p152
      $region50: #{tpu_custom_call.1} parent=47 // pred_check_branch
        %1239 = sbr.rel (%p1237) target = $region52
      $region51: #{tpu_custom_call.1} parent=47 // pred_region
        %s1240 = smul.u32 18, %s24
        %p1241 = scmp.lt.s32.totalorder %s1240, 35
        %s1242 = scalar_select %p1241, %s1240, 35
        %p1243 = scmp.lt.s32.totalorder %s25, 0
        %s1244 = scalar_select %p1243, %s25, 0
        %s1245 = sadd.s32 %s1244, %s1242
        %s1246 = smul.addr %s1245, 4
        %s1247 = scalar_lea.vmem %s3, %s1246
      $region52: #{tpu_custom_call.1} parent=47 // pred_fallthru
        _
    $region48: #{tpu_custom_call.1} parent=5 // pred_fallthru
      _
  $region6: #{tpu_custom_call.1} parent=0 // loop_footer
    %s13 = sadd.s32 1, %s9
  $region7: #{tpu_custom_call.1} parent=0 // loop_footer_branch
    %8 = sbr.rel target = $region3
  $region8: #{tpu_custom_call.1} parent=0 // loop_exit
    _

</llo_original>
